<compile_context>
chip_gen: v5e
topology: v5e:2x2
jax: 0.10.0
libtpu: 0.0.40
codegen_flags: <defaults>
</compile_context>

<pallas_src>
import functools

import jax
import jax.numpy as jnp
from jax import lax
from jax.experimental import pallas as pl
from jax.experimental.pallas import tpu as pltpu


def _round_up(n, m):
    return ((n + m - 1) // m) * m


def _reorder_gate_blocks(w):
    """PyTorch nn.LSTM packs gate blocks as (i, f, g, o) along axis 0.

    Reorder to (i, f, o, g) so the sigmoid gates occupy one contiguous 3H
    range and the tanh gate the trailing H range -> roughly halves the
    per-step transcendental (EUP) work on the serial critical path.
    """
    h = w.shape[0] // 4
    return jnp.concatenate([w[: 2 * h], w[3 * h: 4 * h], w[2 * h: 3 * h]], axis=0)


_UNROLL_FULL_MAX = 16   # fully unroll the recurrence for S <= this
_FORI_UNROLL = 4        # partial unroll for long rollouts


def lstm_actor_kernel(x_ref, h0_ref, c0_ref, w_ih_ref, w_hh_ref, b_ref,
                      w_out_ref, b_out_ref,
                      logits_ref, hn_ref, cn_ref,
                      gates_scr, h_all_scr, *, use_bf16_matmul=False):
    """One batch block: full LSTM recurrence + output head.

    x_ref     : (S, TB, D)     inputs for this batch block
    h0/c0_ref : (TB, H)        initial hidden / cell state
    w_ih_ref  : (D, 4H)        input->gates weights (pre-transposed, order i,f,o,g)
    w_hh_ref  : (H, 4H)        hidden->gates weights (pre-transposed, order i,f,o,g)
    b_ref     : (1, 4H)        combined bias (b_ih + b_hh), permuted
    w_out_ref : (H, Apad)      output Linear weights, zero-padded to 128 lanes
    b_out_ref : (1, Apad)      output Linear bias, zero-padded
    logits_ref: (S, TB, Apad)  lane-dense logits output
    hn/cn_ref : (TB, H)        final hidden / cell state
    gates_scr : (S*TB, 4H)     f32 scratch: time-parallel input projection
    h_all_scr : (S*TB, H)      f32 scratch: collected h_t for the output head
    """
    S, TB, D = x_ref.shape
    H = h0_ref.shape[1]

    def mm(a, b):
        if use_bf16_matmul:  # keep f32 accumulation + f32 cell state
            a = a.astype(jnp.bfloat16)
            b = b.astype(jnp.bfloat16)
        return jnp.dot(a, b, preferred_element_type=jnp.float32)

    # Time-parallel input projection: one MXU pass for all timesteps, spilled
    # to VMEM scratch so the recurrence does not hold S*4H worth of vregs live.
    x2d = x_ref[...].reshape(S * TB, D)
    gates_scr[...] = mm(x2d, w_ih_ref[...]) + b_ref[...]

    h = h0_ref[...]           # (TB, H) f32
    c = c0_ref[...]

    def cell(gates, h, c):
        # Gate order (i, f, o | g): sigmoid over 3H lanes, tanh over H lanes.
        sig = jax.nn.sigmoid(gates[:, : 3 * H])
        g_g = jnp.tanh(gates[:, 3 * H:])
        i_g = sig[:, 0 * H: 1 * H]
        f_g = sig[:, 1 * H: 2 * H]
        o_g = sig[:, 2 * H: 3 * H]
        c_new = f_g * c + i_g * g_g
        h_new = o_g * jnp.tanh(c_new)
        return h_new, c_new

    if S <= _UNROLL_FULL_MAX:
        # Fully unrolled: static slices, maximal LLO scheduling freedom.
        for t in range(S):
            gates = gates_scr[t * TB:(t + 1) * TB, :] + mm(h, w_hh_ref[...])
            h, c = cell(gates, h, c)
            h_all_scr[t * TB:(t + 1) * TB, :] = h
    else:
        # Long rollouts: bounded live ranges / instruction footprint.
        def step(t, carry):
            h, c = carry
            row = pl.multiple_of(t * TB, 8)            # TB % 8 == 0
            gates = gates_scr[pl.ds(row, TB), :] + mm(h, w_hh_ref[...])
            h, c = cell(gates, h, c)
            h_all_scr[pl.ds(row, TB), :] = h
            return h, c

        h, c = lax.fori_loop(0, S, step, (h, c), unroll=_FORI_UNROLL)

    hn_ref[...] = h
    cn_ref[...] = c

    # Output head hoisted out of the loop: one sublane-filled matmul and one
    # lane-dense (unmasked) store of the whole logits slab for this block.
    logits2d = mm(h_all_scr[...], w_out_ref[...]) + b_out_ref[...]
    logits_ref[...] = logits2d.reshape(S, TB, logits_ref.shape[2])


def ppo_lstm_actor_forward(x, h0, c0, params, *, use_bf16_matmul=False):
    """Pallas-backed forward: returns (logits, (hn, cn)) like the nn.Module."""
    S, B, D = x.shape
    H = h0.shape[-1]
    A = params["w_out"].shape[0]

    Bp = max(8, _round_up(B, 8))        # f32 sublane fill, aligned row slices
    Apad = max(128, _round_up(A, 128))  # lane-dense logits store
    # TODO(synk): on v6e/v7x pad 4H / Apad to multiples of 256 once H or
    # num_actions grow (2x256 MXU); 128 already saturates v5e's MXU width.

    # Batch block: split the padded batch into two blocks when there are at
    # least two sublane tiles -> v7x megacore shards them across TensorCores.
    TB = Bp // 2 if (Bp >= 16 and Bp % 16 == 0) else Bp
    grid = (Bp // TB,)

    # --- glue: pad batch, permute gate blocks, pre-transpose / pad weights ---
    if Bp != B:
        pad_b = ((0, 0), (0, Bp - B), (0, 0))
        x_p = jnp.pad(x, pad_b)
        h0_p = jnp.pad(h0, pad_b)
        c0_p = jnp.pad(c0, pad_b)
    else:
        x_p, h0_p, c0_p = x, h0, c0

    w_ih_t = _reorder_gate_blocks(params["w_ih"]).T                         # (D, 4H)
    w_hh_t = _reorder_gate_blocks(params["w_hh"]).T                         # (H, 4H)
    bias = _reorder_gate_blocks(params["b_ih"] + params["b_hh"])[None, :]   # (1, 4H)
    w_out_pad = jnp.pad(params["w_out"].T, ((0, 0), (0, Apad - A)))         # (H, Apad)
    b_out_pad = jnp.pad(params["b_out"], ((0, Apad - A),))[None, :]         # (1, Apad)

    kernel = functools.partial(lstm_actor_kernel, use_bf16_matmul=use_bf16_matmul)

    logits3, hn, cn = pl.pallas_call(
        kernel,
        grid=grid,
        in_specs=[
            pl.BlockSpec((S, TB, D), lambda i: (0, i, 0)),     # x
            pl.BlockSpec((TB, H), lambda i: (i, 0)),           # h0
            pl.BlockSpec((TB, H), lambda i: (i, 0)),           # c0
            pl.BlockSpec((D, 4 * H), lambda i: (0, 0)),        # w_ih (T)
            pl.BlockSpec((H, 4 * H), lambda i: (0, 0)),        # w_hh (T)
            pl.BlockSpec((1, 4 * H), lambda i: (0, 0)),        # bias
            pl.BlockSpec((H, Apad), lambda i: (0, 0)),         # w_out (T, padded)
            pl.BlockSpec((1, Apad), lambda i: (0, 0)),         # b_out (padded)
        ],
        out_specs=[
            pl.BlockSpec((S, TB, Apad), lambda i: (0, i, 0)),  # logits
            pl.BlockSpec((TB, H), lambda i: (i, 0)),           # hn
            pl.BlockSpec((TB, H), lambda i: (i, 0)),           # cn
        ],
        out_shape=(
            jax.ShapeDtypeStruct((S, Bp, Apad), jnp.float32),
            jax.ShapeDtypeStruct((Bp, H), jnp.float32),
            jax.ShapeDtypeStruct((Bp, H), jnp.float32),
        ),
        scratch_shapes=[
            pltpu.VMEM((S * TB, 4 * H), jnp.float32),   # gates_x spill
            pltpu.VMEM((S * TB, H), jnp.float32),       # h_t collector
        ],
        compiler_params=pltpu.CompilerParams(
            dimension_semantics=("parallel",)),
    )(x_p, h0_p[0], c0_p[0], w_ih_t, w_hh_t, bias, w_out_pad, b_out_pad)

    logits = logits3[:, :B, :A]
    return logits, (hn[:B][None], cn[:B][None])


def reference_forward(x, h0, c0, params):
    """Pure-JAX reference (mirrors torch.nn.LSTM + Linear semantics)."""
    H = h0.shape[-1]

    def step(carry, x_t):
        h, c = carry
        gates = (x_t @ params["w_ih"].T + params["b_ih"]
                 + h @ params["w_hh"].T + params["b_hh"])
        i_g = jax.nn.sigmoid(gates[:, 0 * H:1 * H])
        f_g = jax.nn.sigmoid(gates[:, 1 * H:2 * H])
        g_g = jnp.tanh(gates[:, 2 * H:3 * H])
        o_g = jax.nn.sigmoid(gates[:, 3 * H:4 * H])
        c_new = f_g * c + i_g * g_g
        h_new = o_g * jnp.tanh(c_new)
        return (h_new, c_new), h_new

    (hn, cn), hs = jax.lax.scan(step, (h0[0], c0[0]), x)
    logits = hs @ params["w_out"].T + params["b_out"]
    return logits, (hn[None], cn[None])


def init_params(key, input_dim, hidden_size, num_actions):
    """Deterministic init matching PyTorch shapes (uniform +-1/sqrt(H))."""
    k = 1.0 / jnp.sqrt(hidden_size)
    keys = jax.random.split(key, 6)
    return {
        "w_ih": jax.random.uniform(keys[0], (4 * hidden_size, input_dim),
                                   jnp.float32, -k, k),
        "w_hh": jax.random.uniform(keys[1], (4 * hidden_size, hidden_size),
                                   jnp.float32, -k, k),
        "b_ih": jax.random.uniform(keys[2], (4 * hidden_size,),
                                   jnp.float32, -k, k),
        "b_hh": jax.random.uniform(keys[3], (4 * hidden_size,),
                                   jnp.float32, -k, k),
        "w_out": jax.random.uniform(keys[4], (num_actions, hidden_size),
                                    jnp.float32, -k, k),
        "b_out": jax.random.uniform(keys[5], (num_actions,),
                                    jnp.float32, -k, k),
    }


if __name__ == "__main__":
    # BATCH=12 pads to 16 rows -> two 8-row batch blocks -> exercises the
    # parallel grid (and megacore sharding on v7x) plus the padding path.
    SEQ, BATCH, INPUT_DIM, HIDDEN, NUM_ACTIONS = 8, 12, 16, 32, 4

    root = jax.random.PRNGKey(0)
    k_params, k_x, k_h, k_c = jax.random.split(root, 4)

    params = init_params(k_params, INPUT_DIM, HIDDEN, NUM_ACTIONS)
    x = jax.random.normal(k_x, (SEQ, BATCH, INPUT_DIM), jnp.float32)
    h0 = jax.random.normal(k_h, (1, BATCH, HIDDEN), jnp.float32)
    c0 = jax.random.normal(k_c, (1, BATCH, HIDDEN), jnp.float32)

    logits, (hn, cn) = ppo_lstm_actor_forward(x, h0, c0, params)
    jax.block_until_ready((logits, hn, cn))

    # Correctness check against a pure-JAX LSTM reference (exact f32 path).
    ref_logits, (ref_hn, ref_cn) = reference_forward(x, h0, c0, params)
    assert logits.shape == ref_logits.shape
    assert hn.shape == ref_hn.shape and cn.shape == ref_cn.shape
    assert jnp.allclose(logits, ref_logits, atol=1e-5, rtol=1e-5)
    assert jnp.allclose(hn, ref_hn, atol=1e-5, rtol=1e-5)
    assert jnp.allclose(cn, ref_cn, atol=1e-5, rtol=1e-5)

    print("KERNEL_OK")
</pallas_src>

<mosaic_0001>
module attributes {stable_mosaic.version = 11 : i64} {
  func.func @lstm_actor_kernel(%arg0: i32, %arg1: memref<8x8x16xf32, #tpu.memory_space<vmem>>, %arg2: memref<8x32xf32, #tpu.memory_space<vmem>>, %arg3: memref<8x32xf32, #tpu.memory_space<vmem>>, %arg4: memref<16x128xf32, #tpu.memory_space<vmem>>, %arg5: memref<32x128xf32, #tpu.memory_space<vmem>>, %arg6: memref<1x128xf32, #tpu.memory_space<vmem>>, %arg7: memref<32x128xf32, #tpu.memory_space<vmem>>, %arg8: memref<1x128xf32, #tpu.memory_space<vmem>>, %arg9: memref<8x8x128xf32, #tpu.memory_space<vmem>>, %arg10: memref<8x32xf32, #tpu.memory_space<vmem>>, %arg11: memref<8x32xf32, #tpu.memory_space<vmem>>, %arg12: memref<64x128xf32, #tpu.memory_space<vmem>>, %arg13: memref<64x32xf32, #tpu.memory_space<vmem>>) attributes {dimension_semantics = [#tpu.dimension_semantics<parallel>], iteration_bounds = array<i64: 2>, scalar_prefetch = 0 : i64, scratch_operands = 2 : i64, tpu.core_type = #tpu.core_type<tc>, window_params = [{transform_indices = @transform_0, window_bounds = array<i64: 8, 8, 16>}, {transform_indices = @transform_1, window_bounds = array<i64: 8, 32>}, {transform_indices = @transform_2, window_bounds = array<i64: 8, 32>}, {pipeline_mode = #tpu.pipeline_mode<synchronous>, transform_indices = @transform_3, window_bounds = array<i64: 16, 128>}, {pipeline_mode = #tpu.pipeline_mode<synchronous>, transform_indices = @transform_4, window_bounds = array<i64: 32, 128>}, {pipeline_mode = #tpu.pipeline_mode<synchronous>, transform_indices = @transform_5, window_bounds = array<i64: 1, 128>}, {pipeline_mode = #tpu.pipeline_mode<synchronous>, transform_indices = @transform_6, window_bounds = array<i64: 32, 128>}, {pipeline_mode = #tpu.pipeline_mode<synchronous>, transform_indices = @transform_7, window_bounds = array<i64: 1, 128>}, {transform_indices = @transform_8, window_bounds = array<i64: 8, 8, 128>}, {transform_indices = @transform_9, window_bounds = array<i64: 8, 32>}, {transform_indices = @transform_10, window_bounds = array<i64: 8, 32>}]} {
    %c0 = arith.constant 0 : index
    %c0_0 = arith.constant 0 : index
    %c0_1 = arith.constant 0 : index
    %0 = vector.load %arg1[%c0, %c0_0, %c0_1] : memref<8x8x16xf32, #tpu.memory_space<vmem>>, vector<8x8x16xf32>
    %1 = vector.shape_cast %0 : vector<8x8x16xf32> to vector<64x16xf32>
    %c0_2 = arith.constant 0 : index
    %c0_3 = arith.constant 0 : index
    %2 = vector.load %arg4[%c0_2, %c0_3] : memref<16x128xf32, #tpu.memory_space<vmem>>, vector<16x128xf32>
    %cst = arith.constant dense<0.000000e+00> : vector<64x128xf32>
    %3 = tpu.matmul %1, %2, %cst {dimension_numbers = #tpu.dot_dimension_numbers<[1], [0], [0], [1], [0, 0, 1, 1], [], []>} : vector<64x16xf32>, vector<16x128xf32>, vector<64x128xf32> -> vector<64x128xf32>
    %c0_4 = arith.constant 0 : index
    %c0_5 = arith.constant 0 : index
    %4 = vector.load %arg6[%c0_4, %c0_5] : memref<1x128xf32, #tpu.memory_space<vmem>>, vector<1x128xf32>
    %5 = vector.broadcast %4 : vector<1x128xf32> to vector<64x128xf32>
    %6 = arith.addf %3, %5 : vector<64x128xf32>
    %c0_6 = arith.constant 0 : index
    %c0_7 = arith.constant 0 : index
    %7 = vector.load %arg12[%c0_6, %c0_7] : memref<64x128xf32, #tpu.memory_space<vmem>>, vector<64x128xf32>
    tpu.vector_store %arg12[%c0_6, %c0_7], %6 {strides = array<i32>} : memref<64x128xf32, #tpu.memory_space<vmem>>, vector<64x128xf32>,
    %c0_8 = arith.constant 0 : index
    %c0_9 = arith.constant 0 : index
    %8 = vector.load %arg2[%c0_8, %c0_9] : memref<8x32xf32, #tpu.memory_space<vmem>>, vector<8x32xf32>
    %c0_10 = arith.constant 0 : index
    %c0_11 = arith.constant 0 : index
    %9 = vector.load %arg3[%c0_10, %c0_11] : memref<8x32xf32, #tpu.memory_space<vmem>>, vector<8x32xf32>
    %c0_12 = arith.constant 0 : index
    %c0_13 = arith.constant 0 : index
    %10 = vector.load %arg12[%c0_12, %c0_13] : memref<64x128xf32, #tpu.memory_space<vmem>>, vector<8x128xf32>
    %c0_14 = arith.constant 0 : index
    %c0_15 = arith.constant 0 : index
    %11 = vector.load %arg5[%c0_14, %c0_15] : memref<32x128xf32, #tpu.memory_space<vmem>>, vector<32x128xf32>
    %cst_16 = arith.constant dense<0.000000e+00> : vector<8x128xf32>
    %12 = tpu.matmul %8, %11, %cst_16 {dimension_numbers = #tpu.dot_dimension_numbers<[1], [0], [0], [1], [0, 0, 1, 1], [], []>} : vector<8x32xf32>, vector<32x128xf32>, vector<8x128xf32> -> vector<8x128xf32>
    %13 = arith.addf %10, %12 : vector<8x128xf32>
    %14 = vector.extract_strided_slice %13 {offsets = [0, 0], sizes = [8, 96], strides = [1, 1]} : vector<8x128xf32> to vector<8x96xf32>
    %15 = arith.negf %14 : vector<8x96xf32>
    %16 = math.exp %15 : vector<8x96xf32>
    %cst_17 = arith.constant 1.000000e+00 : f32
    %17 = vector.broadcast %cst_17 : f32 to vector<8x96xf32>
    %18 = arith.addf %17, %16 : vector<8x96xf32>
    %19 = arith.divf %17, %18 : vector<8x96xf32>
    %20 = vector.extract_strided_slice %13 {offsets = [0, 96], sizes = [8, 32], strides = [1, 1]} : vector<8x128xf32> to vector<8x32xf32>
    %21 = math.tanh %20 : vector<8x32xf32>
    %22 = vector.extract_strided_slice %19 {offsets = [0, 0], sizes = [8, 32], strides = [1, 1]} : vector<8x96xf32> to vector<8x32xf32>
    %23 = vector.extract_strided_slice %19 {offsets = [0, 32], sizes = [8, 32], strides = [1, 1]} : vector<8x96xf32> to vector<8x32xf32>
    %24 = vector.extract_strided_slice %19 {offsets = [0, 64], sizes = [8, 32], strides = [1, 1]} : vector<8x96xf32> to vector<8x32xf32>
    %25 = arith.mulf %23, %9 : vector<8x32xf32>
    %26 = arith.mulf %22, %21 : vector<8x32xf32>
    %27 = arith.addf %25, %26 : vector<8x32xf32>
    %28 = math.tanh %27 : vector<8x32xf32>
    %29 = arith.mulf %24, %28 : vector<8x32xf32>
    %c0_18 = arith.constant 0 : index
    %c0_19 = arith.constant 0 : index
    %30 = vector.load %arg13[%c0_18, %c0_19] : memref<64x32xf32, #tpu.memory_space<vmem>>, vector<8x32xf32>
    tpu.vector_store %arg13[%c0_18, %c0_19], %29 {strides = array<i32>} : memref<64x32xf32, #tpu.memory_space<vmem>>, vector<8x32xf32>,
    %c8 = arith.constant 8 : index
    %c0_20 = arith.constant 0 : index
    %31 = vector.load %arg12[%c8, %c0_20] : memref<64x128xf32, #tpu.memory_space<vmem>>, vector<8x128xf32>
    %c0_21 = arith.constant 0 : index
    %c0_22 = arith.constant 0 : index
    %32 = vector.load %arg5[%c0_21, %c0_22] : memref<32x128xf32, #tpu.memory_space<vmem>>, vector<32x128xf32>
    %cst_23 = arith.constant dense<0.000000e+00> : vector<8x128xf32>
    %33 = tpu.matmul %29, %32, %cst_23 {dimension_numbers = #tpu.dot_dimension_numbers<[1], [0], [0], [1], [0, 0, 1, 1], [], []>} : vector<8x32xf32>, vector<32x128xf32>, vector<8x128xf32> -> vector<8x128xf32>
    %34 = arith.addf %31, %33 : vector<8x128xf32>
    %35 = vector.extract_strided_slice %34 {offsets = [0, 0], sizes = [8, 96], strides = [1, 1]} : vector<8x128xf32> to vector<8x96xf32>
    %36 = arith.negf %35 : vector<8x96xf32>
    %37 = math.exp %36 : vector<8x96xf32>
    %cst_24 = arith.constant 1.000000e+00 : f32
    %38 = vector.broadcast %cst_24 : f32 to vector<8x96xf32>
    %39 = arith.addf %38, %37 : vector<8x96xf32>
    %40 = arith.divf %38, %39 : vector<8x96xf32>
    %41 = vector.extract_strided_slice %34 {offsets = [0, 96], sizes = [8, 32], strides = [1, 1]} : vector<8x128xf32> to vector<8x32xf32>
    %42 = math.tanh %41 : vector<8x32xf32>
    %43 = vector.extract_strided_slice %40 {offsets = [0, 0], sizes = [8, 32], strides = [1, 1]} : vector<8x96xf32> to vector<8x32xf32>
    %44 = vector.extract_strided_slice %40 {offsets = [0, 32], sizes = [8, 32], strides = [1, 1]} : vector<8x96xf32> to vector<8x32xf32>
    %45 = vector.extract_strided_slice %40 {offsets = [0, 64], sizes = [8, 32], strides = [1, 1]} : vector<8x96xf32> to vector<8x32xf32>
    %46 = arith.mulf %44, %27 : vector<8x32xf32>
    %47 = arith.mulf %43, %42 : vector<8x32xf32>
    %48 = arith.addf %46, %47 : vector<8x32xf32>
    %49 = math.tanh %48 : vector<8x32xf32>
    %50 = arith.mulf %45, %49 : vector<8x32xf32>
    %c8_25 = arith.constant 8 : index
    %c0_26 = arith.constant 0 : index
    %51 = vector.load %arg13[%c8_25, %c0_26] : memref<64x32xf32, #tpu.memory_space<vmem>>, vector<8x32xf32>
    tpu.vector_store %arg13[%c8_25, %c0_26], %50 {strides = array<i32>} : memref<64x32xf32, #tpu.memory_space<vmem>>, vector<8x32xf32>,
    %c16 = arith.constant 16 : index
    %c0_27 = arith.constant 0 : index
    %52 = vector.load %arg12[%c16, %c0_27] : memref<64x128xf32, #tpu.memory_space<vmem>>, vector<8x128xf32>
    %c0_28 = arith.constant 0 : index
    %c0_29 = arith.constant 0 : index
    %53 = vector.load %arg5[%c0_28, %c0_29] : memref<32x128xf32, #tpu.memory_space<vmem>>, vector<32x128xf32>
    %cst_30 = arith.constant dense<0.000000e+00> : vector<8x128xf32>
    %54 = tpu.matmul %50, %53, %cst_30 {dimension_numbers = #tpu.dot_dimension_numbers<[1], [0], [0], [1], [0, 0, 1, 1], [], []>} : vector<8x32xf32>, vector<32x128xf32>, vector<8x128xf32> -> vector<8x128xf32>
    %55 = arith.addf %52, %54 : vector<8x128xf32>
    %56 = vector.extract_strided_slice %55 {offsets = [0, 0], sizes = [8, 96], strides = [1, 1]} : vector<8x128xf32> to vector<8x96xf32>
    %57 = arith.negf %56 : vector<8x96xf32>
    %58 = math.exp %57 : vector<8x96xf32>
    %cst_31 = arith.constant 1.000000e+00 : f32
    %59 = vector.broadcast %cst_31 : f32 to vector<8x96xf32>
    %60 = arith.addf %59, %58 : vector<8x96xf32>
    %61 = arith.divf %59, %60 : vector<8x96xf32>
    %62 = vector.extract_strided_slice %55 {offsets = [0, 96], sizes = [8, 32], strides = [1, 1]} : vector<8x128xf32> to vector<8x32xf32>
    %63 = math.tanh %62 : vector<8x32xf32>
    %64 = vector.extract_strided_slice %61 {offsets = [0, 0], sizes = [8, 32], strides = [1, 1]} : vector<8x96xf32> to vector<8x32xf32>
    %65 = vector.extract_strided_slice %61 {offsets = [0, 32], sizes = [8, 32], strides = [1, 1]} : vector<8x96xf32> to vector<8x32xf32>
    %66 = vector.extract_strided_slice %61 {offsets = [0, 64], sizes = [8, 32], strides = [1, 1]} : vector<8x96xf32> to vector<8x32xf32>
    %67 = arith.mulf %65, %48 : vector<8x32xf32>
    %68 = arith.mulf %64, %63 : vector<8x32xf32>
    %69 = arith.addf %67, %68 : vector<8x32xf32>
    %70 = math.tanh %69 : vector<8x32xf32>
    %71 = arith.mulf %66, %70 : vector<8x32xf32>
    %c16_32 = arith.constant 16 : index
    %c0_33 = arith.constant 0 : index
    %72 = vector.load %arg13[%c16_32, %c0_33] : memref<64x32xf32, #tpu.memory_space<vmem>>, vector<8x32xf32>
    tpu.vector_store %arg13[%c16_32, %c0_33], %71 {strides = array<i32>} : memref<64x32xf32, #tpu.memory_space<vmem>>, vector<8x32xf32>,
    %c24 = arith.constant 24 : index
    %c0_34 = arith.constant 0 : index
    %73 = vector.load %arg12[%c24, %c0_34] : memref<64x128xf32, #tpu.memory_space<vmem>>, vector<8x128xf32>
    %c0_35 = arith.constant 0 : index
    %c0_36 = arith.constant 0 : index
    %74 = vector.load %arg5[%c0_35, %c0_36] : memref<32x128xf32, #tpu.memory_space<vmem>>, vector<32x128xf32>
    %cst_37 = arith.constant dense<0.000000e+00> : vector<8x128xf32>
    %75 = tpu.matmul %71, %74, %cst_37 {dimension_numbers = #tpu.dot_dimension_numbers<[1], [0], [0], [1], [0, 0, 1, 1], [], []>} : vector<8x32xf32>, vector<32x128xf32>, vector<8x128xf32> -> vector<8x128xf32>
    %76 = arith.addf %73, %75 : vector<8x128xf32>
    %77 = vector.extract_strided_slice %76 {offsets = [0, 0], sizes = [8, 96], strides = [1, 1]} : vector<8x128xf32> to vector<8x96xf32>
    %78 = arith.negf %77 : vector<8x96xf32>
    %79 = math.exp %78 : vector<8x96xf32>
    %cst_38 = arith.constant 1.000000e+00 : f32
    %80 = vector.broadcast %cst_38 : f32 to vector<8x96xf32>
    %81 = arith.addf %80, %79 : vector<8x96xf32>
    %82 = arith.divf %80, %81 : vector<8x96xf32>
    %83 = vector.extract_strided_slice %76 {offsets = [0, 96], sizes = [8, 32], strides = [1, 1]} : vector<8x128xf32> to vector<8x32xf32>
    %84 = math.tanh %83 : vector<8x32xf32>
    %85 = vector.extract_strided_slice %82 {offsets = [0, 0], sizes = [8, 32], strides = [1, 1]} : vector<8x96xf32> to vector<8x32xf32>
    %86 = vector.extract_strided_slice %82 {offsets = [0, 32], sizes = [8, 32], strides = [1, 1]} : vector<8x96xf32> to vector<8x32xf32>
    %87 = vector.extract_strided_slice %82 {offsets = [0, 64], sizes = [8, 32], strides = [1, 1]} : vector<8x96xf32> to vector<8x32xf32>
    %88 = arith.mulf %86, %69 : vector<8x32xf32>
    %89 = arith.mulf %85, %84 : vector<8x32xf32>
    %90 = arith.addf %88, %89 : vector<8x32xf32>
    %91 = math.tanh %90 : vector<8x32xf32>
    %92 = arith.mulf %87, %91 : vector<8x32xf32>
    %c24_39 = arith.constant 24 : index
    %c0_40 = arith.constant 0 : index
    %93 = vector.load %arg13[%c24_39, %c0_40] : memref<64x32xf32, #tpu.memory_space<vmem>>, vector<8x32xf32>
    tpu.vector_store %arg13[%c24_39, %c0_40], %92 {strides = array<i32>} : memref<64x32xf32, #tpu.memory_space<vmem>>, vector<8x32xf32>,
    %c32 = arith.constant 32 : index
    %c0_41 = arith.constant 0 : index
    %94 = vector.load %arg12[%c32, %c0_41] : memref<64x128xf32, #tpu.memory_space<vmem>>, vector<8x128xf32>
    %c0_42 = arith.constant 0 : index
    %c0_43 = arith.constant 0 : index
    %95 = vector.load %arg5[%c0_42, %c0_43] : memref<32x128xf32, #tpu.memory_space<vmem>>, vector<32x128xf32>
    %cst_44 = arith.constant dense<0.000000e+00> : vector<8x128xf32>
    %96 = tpu.matmul %92, %95, %cst_44 {dimension_numbers = #tpu.dot_dimension_numbers<[1], [0], [0], [1], [0, 0, 1, 1], [], []>} : vector<8x32xf32>, vector<32x128xf32>, vector<8x128xf32> -> vector<8x128xf32>
    %97 = arith.addf %94, %96 : vector<8x128xf32>
    %98 = vector.extract_strided_slice %97 {offsets = [0, 0], sizes = [8, 96], strides = [1, 1]} : vector<8x128xf32> to vector<8x96xf32>
    %99 = arith.negf %98 : vector<8x96xf32>
    %100 = math.exp %99 : vector<8x96xf32>
    %cst_45 = arith.constant 1.000000e+00 : f32
    %101 = vector.broadcast %cst_45 : f32 to vector<8x96xf32>
    %102 = arith.addf %101, %100 : vector<8x96xf32>
    %103 = arith.divf %101, %102 : vector<8x96xf32>
    %104 = vector.extract_strided_slice %97 {offsets = [0, 96], sizes = [8, 32], strides = [1, 1]} : vector<8x128xf32> to vector<8x32xf32>
    %105 = math.tanh %104 : vector<8x32xf32>
    %106 = vector.extract_strided_slice %103 {offsets = [0, 0], sizes = [8, 32], strides = [1, 1]} : vector<8x96xf32> to vector<8x32xf32>
    %107 = vector.extract_strided_slice %103 {offsets = [0, 32], sizes = [8, 32], strides = [1, 1]} : vector<8x96xf32> to vector<8x32xf32>
    %108 = vector.extract_strided_slice %103 {offsets = [0, 64], sizes = [8, 32], strides = [1, 1]} : vector<8x96xf32> to vector<8x32xf32>
    %109 = arith.mulf %107, %90 : vector<8x32xf32>
    %110 = arith.mulf %106, %105 : vector<8x32xf32>
    %111 = arith.addf %109, %110 : vector<8x32xf32>
    %112 = math.tanh %111 : vector<8x32xf32>
    %113 = arith.mulf %108, %112 : vector<8x32xf32>
    %c32_46 = arith.constant 32 : index
    %c0_47 = arith.constant 0 : index
    %114 = vector.load %arg13[%c32_46, %c0_47] : memref<64x32xf32, #tpu.memory_space<vmem>>, vector<8x32xf32>
    tpu.vector_store %arg13[%c32_46, %c0_47], %113 {strides = array<i32>} : memref<64x32xf32, #tpu.memory_space<vmem>>, vector<8x32xf32>,
    %c40 = arith.constant 40 : index
    %c0_48 = arith.constant 0 : index
    %115 = vector.load %arg12[%c40, %c0_48] : memref<64x128xf32, #tpu.memory_space<vmem>>, vector<8x128xf32>
    %c0_49 = arith.constant 0 : index
    %c0_50 = arith.constant 0 : index
    %116 = vector.load %arg5[%c0_49, %c0_50] : memref<32x128xf32, #tpu.memory_space<vmem>>, vector<32x128xf32>
    %cst_51 = arith.constant dense<0.000000e+00> : vector<8x128xf32>
    %117 = tpu.matmul %113, %116, %cst_51 {dimension_numbers = #tpu.dot_dimension_numbers<[1], [0], [0], [1], [0, 0, 1, 1], [], []>} : vector<8x32xf32>, vector<32x128xf32>, vector<8x128xf32> -> vector<8x128xf32>
    %118 = arith.addf %115, %117 : vector<8x128xf32>
    %119 = vector.extract_strided_slice %118 {offsets = [0, 0], sizes = [8, 96], strides = [1, 1]} : vector<8x128xf32> to vector<8x96xf32>
    %120 = arith.negf %119 : vector<8x96xf32>
    %121 = math.exp %120 : vector<8x96xf32>
    %cst_52 = arith.constant 1.000000e+00 : f32
    %122 = vector.broadcast %cst_52 : f32 to vector<8x96xf32>
    %123 = arith.addf %122, %121 : vector<8x96xf32>
    %124 = arith.divf %122, %123 : vector<8x96xf32>
    %125 = vector.extract_strided_slice %118 {offsets = [0, 96], sizes = [8, 32], strides = [1, 1]} : vector<8x128xf32> to vector<8x32xf32>
    %126 = math.tanh %125 : vector<8x32xf32>
    %127 = vector.extract_strided_slice %124 {offsets = [0, 0], sizes = [8, 32], strides = [1, 1]} : vector<8x96xf32> to vector<8x32xf32>
    %128 = vector.extract_strided_slice %124 {offsets = [0, 32], sizes = [8, 32], strides = [1, 1]} : vector<8x96xf32> to vector<8x32xf32>
    %129 = vector.extract_strided_slice %124 {offsets = [0, 64], sizes = [8, 32], strides = [1, 1]} : vector<8x96xf32> to vector<8x32xf32>
    %130 = arith.mulf %128, %111 : vector<8x32xf32>
    %131 = arith.mulf %127, %126 : vector<8x32xf32>
    %132 = arith.addf %130, %131 : vector<8x32xf32>
    %133 = math.tanh %132 : vector<8x32xf32>
    %134 = arith.mulf %129, %133 : vector<8x32xf32>
    %c40_53 = arith.constant 40 : index
    %c0_54 = arith.constant 0 : index
    %135 = vector.load %arg13[%c40_53, %c0_54] : memref<64x32xf32, #tpu.memory_space<vmem>>, vector<8x32xf32>
    tpu.vector_store %arg13[%c40_53, %c0_54], %134 {strides = array<i32>} : memref<64x32xf32, #tpu.memory_space<vmem>>, vector<8x32xf32>,
    %c48 = arith.constant 48 : index
    %c0_55 = arith.constant 0 : index
    %136 = vector.load %arg12[%c48, %c0_55] : memref<64x128xf32, #tpu.memory_space<vmem>>, vector<8x128xf32>
    %c0_56 = arith.constant 0 : index
    %c0_57 = arith.constant 0 : index
    %137 = vector.load %arg5[%c0_56, %c0_57] : memref<32x128xf32, #tpu.memory_space<vmem>>, vector<32x128xf32>
    %cst_58 = arith.constant dense<0.000000e+00> : vector<8x128xf32>
    %138 = tpu.matmul %134, %137, %cst_58 {dimension_numbers = #tpu.dot_dimension_numbers<[1], [0], [0], [1], [0, 0, 1, 1], [], []>} : vector<8x32xf32>, vector<32x128xf32>, vector<8x128xf32> -> vector<8x128xf32>
    %139 = arith.addf %136, %138 : vector<8x128xf32>
    %140 = vector.extract_strided_slice %139 {offsets = [0, 0], sizes = [8, 96], strides = [1, 1]} : vector<8x128xf32> to vector<8x96xf32>
    %141 = arith.negf %140 : vector<8x96xf32>
    %142 = math.exp %141 : vector<8x96xf32>
    %cst_59 = arith.constant 1.000000e+00 : f32
    %143 = vector.broadcast %cst_59 : f32 to vector<8x96xf32>
    %144 = arith.addf %143, %142 : vector<8x96xf32>
    %145 = arith.divf %143, %144 : vector<8x96xf32>
    %146 = vector.extract_strided_slice %139 {offsets = [0, 96], sizes = [8, 32], strides = [1, 1]} : vector<8x128xf32> to vector<8x32xf32>
    %147 = math.tanh %146 : vector<8x32xf32>
    %148 = vector.extract_strided_slice %145 {offsets = [0, 0], sizes = [8, 32], strides = [1, 1]} : vector<8x96xf32> to vector<8x32xf32>
    %149 = vector.extract_strided_slice %145 {offsets = [0, 32], sizes = [8, 32], strides = [1, 1]} : vector<8x96xf32> to vector<8x32xf32>
    %150 = vector.extract_strided_slice %145 {offsets = [0, 64], sizes = [8, 32], strides = [1, 1]} : vector<8x96xf32> to vector<8x32xf32>
    %151 = arith.mulf %149, %132 : vector<8x32xf32>
    %152 = arith.mulf %148, %147 : vector<8x32xf32>
    %153 = arith.addf %151, %152 : vector<8x32xf32>
    %154 = math.tanh %153 : vector<8x32xf32>
    %155 = arith.mulf %150, %154 : vector<8x32xf32>
    %c48_60 = arith.constant 48 : index
    %c0_61 = arith.constant 0 : index
    %156 = vector.load %arg13[%c48_60, %c0_61] : memref<64x32xf32, #tpu.memory_space<vmem>>, vector<8x32xf32>
    tpu.vector_store %arg13[%c48_60, %c0_61], %155 {strides = array<i32>} : memref<64x32xf32, #tpu.memory_space<vmem>>, vector<8x32xf32>,
    %c56 = arith.constant 56 : index
    %c0_62 = arith.constant 0 : index
    %157 = vector.load %arg12[%c56, %c0_62] : memref<64x128xf32, #tpu.memory_space<vmem>>, vector<8x128xf32>
    %c0_63 = arith.constant 0 : index
    %c0_64 = arith.constant 0 : index
    %158 = vector.load %arg5[%c0_63, %c0_64] : memref<32x128xf32, #tpu.memory_space<vmem>>, vector<32x128xf32>
    %cst_65 = arith.constant dense<0.000000e+00> : vector<8x128xf32>
    %159 = tpu.matmul %155, %158, %cst_65 {dimension_numbers = #tpu.dot_dimension_numbers<[1], [0], [0], [1], [0, 0, 1, 1], [], []>} : vector<8x32xf32>, vector<32x128xf32>, vector<8x128xf32> -> vector<8x128xf32>
    %160 = arith.addf %157, %159 : vector<8x128xf32>
    %161 = vector.extract_strided_slice %160 {offsets = [0, 0], sizes = [8, 96], strides = [1, 1]} : vector<8x128xf32> to vector<8x96xf32>
    %162 = arith.negf %161 : vector<8x96xf32>
    %163 = math.exp %162 : vector<8x96xf32>
    %cst_66 = arith.constant 1.000000e+00 : f32
    %164 = vector.broadcast %cst_66 : f32 to vector<8x96xf32>
    %165 = arith.addf %164, %163 : vector<8x96xf32>
    %166 = arith.divf %164, %165 : vector<8x96xf32>
    %167 = vector.extract_strided_slice %160 {offsets = [0, 96], sizes = [8, 32], strides = [1, 1]} : vector<8x128xf32> to vector<8x32xf32>
    %168 = math.tanh %167 : vector<8x32xf32>
    %169 = vector.extract_strided_slice %166 {offsets = [0, 0], sizes = [8, 32], strides = [1, 1]} : vector<8x96xf32> to vector<8x32xf32>
    %170 = vector.extract_strided_slice %166 {offsets = [0, 32], sizes = [8, 32], strides = [1, 1]} : vector<8x96xf32> to vector<8x32xf32>
    %171 = vector.extract_strided_slice %166 {offsets = [0, 64], sizes = [8, 32], strides = [1, 1]} : vector<8x96xf32> to vector<8x32xf32>
    %172 = arith.mulf %170, %153 : vector<8x32xf32>
    %173 = arith.mulf %169, %168 : vector<8x32xf32>
    %174 = arith.addf %172, %173 : vector<8x32xf32>
    %175 = math.tanh %174 : vector<8x32xf32>
    %176 = arith.mulf %171, %175 : vector<8x32xf32>
    %c56_67 = arith.constant 56 : index
    %c0_68 = arith.constant 0 : index
    %177 = vector.load %arg13[%c56_67, %c0_68] : memref<64x32xf32, #tpu.memory_space<vmem>>, vector<8x32xf32>
    tpu.vector_store %arg13[%c56_67, %c0_68], %176 {strides = array<i32>} : memref<64x32xf32, #tpu.memory_space<vmem>>, vector<8x32xf32>,
    %c0_69 = arith.constant 0 : index
    %c0_70 = arith.constant 0 : index
    %178 = vector.load %arg10[%c0_69, %c0_70] : memref<8x32xf32, #tpu.memory_space<vmem>>, vector<8x32xf32>
    tpu.vector_store %arg10[%c0_69, %c0_70], %176 {strides = array<i32>} : memref<8x32xf32, #tpu.memory_space<vmem>>, vector<8x32xf32>,
    %c0_71 = arith.constant 0 : index
    %c0_72 = arith.constant 0 : index
    %179 = vector.load %arg11[%c0_71, %c0_72] : memref<8x32xf32, #tpu.memory_space<vmem>>, vector<8x32xf32>
    tpu.vector_store %arg11[%c0_71, %c0_72], %174 {strides = array<i32>} : memref<8x32xf32, #tpu.memory_space<vmem>>, vector<8x32xf32>,
    %c0_73 = arith.constant 0 : index
    %c0_74 = arith.constant 0 : index
    %180 = vector.load %arg13[%c0_73, %c0_74] : memref<64x32xf32, #tpu.memory_space<vmem>>, vector<64x32xf32>
    %c0_75 = arith.constant 0 : index
    %c0_76 = arith.constant 0 : index
    %181 = vector.load %arg7[%c0_75, %c0_76] : memref<32x128xf32, #tpu.memory_space<vmem>>, vector<32x128xf32>
    %cst_77 = arith.constant dense<0.000000e+00> : vector<64x128xf32>
    %182 = tpu.matmul %180, %181, %cst_77 {dimension_numbers = #tpu.dot_dimension_numbers<[1], [0], [0], [1], [0, 0, 1, 1], [], []>} : vector<64x32xf32>, vector<32x128xf32>, vector<64x128xf32> -> vector<64x128xf32>
    %c0_78 = arith.constant 0 : index
    %c0_79 = arith.constant 0 : index
    %183 = vector.load %arg8[%c0_78, %c0_79] : memref<1x128xf32, #tpu.memory_space<vmem>>, vector<1x128xf32>
    %184 = vector.broadcast %183 : vector<1x128xf32> to vector<64x128xf32>
    %185 = arith.addf %182, %184 : vector<64x128xf32>
    %186 = vector.shape_cast %185 : vector<64x128xf32> to vector<8x8x128xf32>
    %c0_80 = arith.constant 0 : index
    %c0_81 = arith.constant 0 : index
    %c0_82 = arith.constant 0 : index
    %187 = vector.load %arg9[%c0_80, %c0_81, %c0_82] : memref<8x8x128xf32, #tpu.memory_space<vmem>>, vector<8x8x128xf32>
    tpu.vector_store %arg9[%c0_80, %c0_81, %c0_82], %186 {strides = array<i32>} : memref<8x8x128xf32, #tpu.memory_space<vmem>>, vector<8x8x128xf32>,
    return
  }
  func.func @transform_0(%arg0: i32) -> (i32, i32, i32) {
    %c0_i32 = arith.constant 0 : i32
    %c0_i32_0 = arith.constant 0 : i32
    %c0_i32_1 = arith.constant 0 : i32
    return %c0_i32, %arg0, %c0_i32_0 : i32, i32, i32
  }
  func.func @transform_1(%arg0: i32) -> (i32, i32) {
    %c0_i32 = arith.constant 0 : i32
    %c0_i32_0 = arith.constant 0 : i32
    return %arg0, %c0_i32 : i32, i32
  }
  func.func @transform_2(%arg0: i32) -> (i32, i32) {
    %c0_i32 = arith.constant 0 : i32
    %c0_i32_0 = arith.constant 0 : i32
    return %arg0, %c0_i32 : i32, i32
  }
  func.func @transform_3(%arg0: i32) -> (i32, i32) {
    %c0_i32 = arith.constant 0 : i32
    %c0_i32_0 = arith.constant 0 : i32
    %c0_i32_1 = arith.constant 0 : i32
    return %c0_i32, %c0_i32_0 : i32, i32
  }
  func.func @transform_4(%arg0: i32) -> (i32, i32) {
    %c0_i32 = arith.constant 0 : i32
    %c0_i32_0 = arith.constant 0 : i32
    %c0_i32_1 = arith.constant 0 : i32
    return %c0_i32, %c0_i32_0 : i32, i32
  }
  func.func @transform_5(%arg0: i32) -> (i32, i32) {
    %c0_i32 = arith.constant 0 : i32
    %c0_i32_0 = arith.constant 0 : i32
    %c0_i32_1 = arith.constant 0 : i32
    return %c0_i32, %c0_i32_0 : i32, i32
  }
  func.func @transform_6(%arg0: i32) -> (i32, i32) {
    %c0_i32 = arith.constant 0 : i32
    %c0_i32_0 = arith.constant 0 : i32
    %c0_i32_1 = arith.constant 0 : i32
    return %c0_i32, %c0_i32_0 : i32, i32
  }
  func.func @transform_7(%arg0: i32) -> (i32, i32) {
    %c0_i32 = arith.constant 0 : i32
    %c0_i32_0 = arith.constant 0 : i32
    %c0_i32_1 = arith.constant 0 : i32
    return %c0_i32, %c0_i32_0 : i32, i32
  }
  func.func @transform_8(%arg0: i32) -> (i32, i32, i32) {
    %c0_i32 = arith.constant 0 : i32
    %c0_i32_0 = arith.constant 0 : i32
    %c0_i32_1 = arith.constant 0 : i32
    return %c0_i32, %arg0, %c0_i32_0 : i32, i32, i32
  }
  func.func @transform_9(%arg0: i32) -> (i32, i32) {
    %c0_i32 = arith.constant 0 : i32
    %c0_i32_0 = arith.constant 0 : i32
    return %arg0, %c0_i32 : i32, i32
  }
  func.func @transform_10(%arg0: i32) -> (i32, i32) {
    %c0_i32 = arith.constant 0 : i32
    %c0_i32_0 = arith.constant 0 : i32
    return %arg0, %c0_i32 : i32, i32
  }
}

</mosaic_0001>

<llo_original>
// kernel: tpu_custom_call.1
$region0: #{tpu_custom_call.1}
  #allocation0 [shape = 'u32[]', space=smem, size = 0x4, offset = 0x4, fixed_abs, tag = 'smem constant byte address 0x4 - core index']
  #allocation1 [shape = 'u32[72,128]{1,0:T(1,128)}', space=vmem, size = 0x9000, scoped, tag = 'internal scratch']
  #allocation2 [shape = 'f32[64,128]{1,0:T(8,128)}', space=vmem, size = 0x8000, scoped, tag = 'scratch operand']
  #allocation3 [shape = 'f32[64,32]{1,0:T(8,128)}', space=vmem, size = 0x8000, scoped, tag = 'scratch operand']
  %s0 = inlined_call_operand.hbm [shape: f32[8,16,16], index: 0, kind: input, shape index: {}]
  %s1 = inlined_call_operand.hbm [shape: f32[16,32], index: 1, kind: input, shape index: {}]
  %s2 = inlined_call_operand.hbm [shape: f32[16,32], index: 2, kind: input, shape index: {}]
  %s3 = inlined_call_operand.hbm [shape: f32[16,128], index: 3, kind: input, shape index: {}]
  %s4 = inlined_call_operand.hbm [shape: f32[32,128], index: 4, kind: input, shape index: {}]
  %s5 = inlined_call_operand.vmem [shape: f32[1,128], index: 5, kind: input, shape index: {}]
  %s6 = inlined_call_operand.hbm [shape: f32[32,128], index: 6, kind: input, shape index: {}]
  %s7 = inlined_call_operand.vmem [shape: f32[1,128], index: 7, kind: input, shape index: {}]
  %s8 = inlined_call_operand.hbm [shape: f32[8,16,128], index: 8, kind: output, shape index: {0}]
  %s9 = inlined_call_operand.hbm [shape: f32[16,32], index: 9, kind: output, shape index: {1}]
  %s10 = inlined_call_operand.hbm [shape: f32[16,32], index: 10, kind: output, shape index: {2}]
  %11 = xla_tuple %s8, %s9, %s10
  %s12 = sld [smem:[#allocation0]]
  $region105: #{tpu_custom_call.1} parent=0
    _
  %s14 = ssub.s32 1, %s12
  %s15 = scalar_select 0, %s14, %s12
  $region1: #{tpu_custom_call.1} parent=0
    #allocation4 [shape = 'u8[65536]{0}', space=vmem, size = 0x10000, scoped, tag = 'input window, operand 0']
    #allocation5 [shape = 's32[2]{0}', space=sflag, size = 0x8, scoped, tag = 'scoped memory for tpu_custom_call.1']
    #allocation6 [shape = 's32[2]{0}', space=sflag, size = 0x8, scoped, tag = 'scoped memory for tpu_custom_call.1']
    #allocation7 [shape = 'u8[8192]{0}', space=vmem, size = 0x2000, scoped, tag = 'input window, operand 1']
    #allocation8 [shape = 's32[2]{0}', space=sflag, size = 0x8, scoped, tag = 'scoped memory for tpu_custom_call.1']
    #allocation9 [shape = 'u8[8192]{0}', space=vmem, size = 0x2000, scoped, tag = 'input window, operand 2']
    #allocation10 [shape = 'u8[8192]{0}', space=vmem, size = 0x2000, scoped, tag = 'input window, operand 3, single buffered']
    #allocation11 [shape = 's32[1]{0}', space=sflag, size = 0x4, scoped, tag = 'scoped memory for tpu_custom_call.1']
    #allocation12 [shape = 'u8[16384]{0}', space=vmem, size = 0x4000, scoped, tag = 'input window, operand 4, single buffered']
    #allocation13 [shape = 'u8[16384]{0}', space=vmem, size = 0x4000, scoped, tag = 'input window, operand 6, single buffered']
    #allocation14 [shape = 's32[1]{0}', space=sflag, size = 0x4, scoped, tag = 'scoped memory for tpu_custom_call.1']
    #allocation15 [shape = 'u8[65536]{0}', space=vmem, size = 0x10000, scoped, tag = 'output window, operand 0']
    #allocation16 [shape = 'u8[8192]{0}', space=vmem, size = 0x2000, scoped, tag = 'output window, operand 1']
    #allocation17 [shape = 's32[2]{0}', space=sflag, size = 0x8, scoped, tag = 'scoped memory for tpu_custom_call.1']
    #allocation18 [shape = 'u8[8192]{0}', space=vmem, size = 0x2000, scoped, tag = 'output window, operand 2']
    %16 = vsyncpa [#allocation5], 0
    %s17 = scalar_lea.sflag [#allocation5], 1
    %18 = vsyncpa %s17, 0
    %19 = vsyncpa [#allocation8], 0
    %s20 = scalar_lea.sflag [#allocation8], 1
    %21 = vsyncpa %s20, 0
    %22 = vsyncpa [#allocation11], 0
    %23 = vsyncpa [#allocation14], 0
    %24 = vsyncpa [#allocation6], 0
    %s25 = scalar_lea.sflag [#allocation6], 1
    %26 = vsyncpa %s25, 0
    %27 = vsyncpa [#allocation17], 0
    %s28 = scalar_lea.sflag [#allocation17], 1
    %29 = vsyncpa %s28, 0
    loop: start=0, step=1, limit=4
    $region2: #{tpu_custom_call.1} parent=1 // loop_pre_header
      _
    $region3: #{tpu_custom_call.1} parent=1 // loop_header
      %s31 = sphi 0, %s35
      %p32 = scmp.ge.s32.totalorder %s31, 4
      %s41 = sphi 0, %s43
      %s44 = sphi 0, %s41
      %s45 = sphi 0, %s44
      %s61 = sphi 0, %s45
      %s67 = sphi 0, %s69
      %s70 = sphi 0, %s67
      %s71 = sphi 0, %s70
      %s87 = sphi 0, %s71
      %s93 = sphi 0, %s95
      %s96 = sphi 0, %s93
      %s97 = sphi 0, %s96
      %s113 = sphi 0, %s97
      %s117 = sphi 0, %s117
      %s119 = sphi 0, %s117
      %s120 = sphi 0, %s119
      %s134 = sphi 0, %s120
      %s138 = sphi 0, %s138
      %s140 = sphi 0, %s138
      %s141 = sphi 0, %s140
      %s155 = sphi 0, %s141
      %s159 = sphi 0, %s159
      %s161 = sphi 0, %s159
      %s162 = sphi 0, %s161
      %s176 = sphi 0, %s162
      %s180 = sphi 0, %s180
      %s182 = sphi 0, %s180
      %s183 = sphi 0, %s182
      %s197 = sphi 0, %s183
      %s201 = sphi 0, %s201
      %s203 = sphi 0, %s201
      %s204 = sphi 0, %s203
      %s218 = sphi 0, %s204
      %s224 = sphi 0, %s226
      %s227 = sphi 0, %s224
      %s228 = sphi 0, %s227
      %s244 = sphi 0, %s228
      %s250 = sphi 0, %s252
      %s253 = sphi 0, %s250
      %s254 = sphi 0, %s253
      %s270 = sphi 0, %s254
      %s276 = sphi 0, %s278
      %s279 = sphi 0, %s276
      %s280 = sphi 0, %s279
      %s296 = sphi 0, %s280
    $region4: #{tpu_custom_call.1} parent=1 // loop_header_branch
      %34 = sbr.rel (%p32) target = $region8
    $region5: #{tpu_custom_call.1} parent=1 // loop_body
      %s36 = ssub.s32 %s31, 1
      %s37 = ssub.s32 %s31, 2
      %s38 = sadd.s32 %s31, 1
      %s39 = ssub.s32 %s31, %s38
      %p40 = scmp.eq.s32.totalorder %s39, 0
      %s42 = sadd.s32 %s41, 1
      %s43 = scalar_select %p40, %s41, %s42
      %p46 = pneg %p40
      %p47 = scmp.eq.s32.totalorder %s31, 1
      %p48 = por %p46, %p47
      %p49 = scmp.ne.s32.totalorder %s41, %s44
      %p50 = scmp.eq.s32.totalorder %s31, 0
      %p51 = por %p49, %p50
      %p52 = scmp.ne.s32.totalorder %s41, %s44
      %p53 = scmp.eq.s32.totalorder %s36, 1
      %p54 = por %p52, %p53
      %p55 = scmp.ne.s32.totalorder %s44, %s45
      %p56 = scmp.eq.s32.totalorder %s36, 0
      %p57 = por %p55, %p56
      %p58 = scmp.ne.s32.totalorder %s44, %s45
      %p59 = scmp.eq.s32.totalorder %s37, 1
      %p60 = por %p58, %p59
      %p62 = scmp.ne.s32.totalorder %s45, %s61
      %p63 = scmp.eq.s32.totalorder %s37, 0
      %p64 = por %p62, %p63
      %s65 = ssub.s32 %s31, %s38
      %p66 = scmp.eq.s32.totalorder %s65, 0
      %s68 = sadd.s32 %s67, 1
      %s69 = scalar_select %p66, %s67, %s68
      %p72 = pneg %p66
      %p73 = scmp.eq.s32.totalorder %s31, 1
      %p74 = por %p72, %p73
      %p75 = scmp.ne.s32.totalorder %s67, %s70
      %p76 = scmp.eq.s32.totalorder %s31, 0
      %p77 = por %p75, %p76
      %p78 = scmp.ne.s32.totalorder %s67, %s70
      %p79 = scmp.eq.s32.totalorder %s36, 1
      %p80 = por %p78, %p79
      %p81 = scmp.ne.s32.totalorder %s70, %s71
      %p82 = scmp.eq.s32.totalorder %s36, 0
      %p83 = por %p81, %p82
      %p84 = scmp.ne.s32.totalorder %s70, %s71
      %p85 = scmp.eq.s32.totalorder %s37, 1
      %p86 = por %p84, %p85
      %p88 = scmp.ne.s32.totalorder %s71, %s87
      %p89 = scmp.eq.s32.totalorder %s37, 0
      %p90 = por %p88, %p89
      %s91 = ssub.s32 %s31, %s38
      %p92 = scmp.eq.s32.totalorder %s91, 0
      %s94 = sadd.s32 %s93, 1
      %s95 = scalar_select %p92, %s93, %s94
      %p98 = pneg %p92
      %p99 = scmp.eq.s32.totalorder %s31, 1
      %p100 = por %p98, %p99
      %p101 = scmp.ne.s32.totalorder %s93, %s96
      %p102 = scmp.eq.s32.totalorder %s31, 0
      %p103 = por %p101, %p102
      %p104 = scmp.ne.s32.totalorder %s93, %s96
      %p105 = scmp.eq.s32.totalorder %s36, 1
      %p106 = por %p104, %p105
      %p107 = scmp.ne.s32.totalorder %s96, %s97
      %p108 = scmp.eq.s32.totalorder %s36, 0
      %p109 = por %p107, %p108
      %p110 = scmp.ne.s32.totalorder %s96, %s97
      %p111 = scmp.eq.s32.totalorder %s37, 1
      %p112 = por %p110, %p111
      %p114 = scmp.ne.s32.totalorder %s97, %s113
      %p115 = scmp.eq.s32.totalorder %s37, 0
      %p116 = por %p114, %p115
      %s118 = sadd.s32 %s117, 1
      %p121 = scmp.eq.s32.totalorder %s31, 1
      %p122 = scmp.ne.s32.totalorder %s117, %s119
      %p123 = scmp.eq.s32.totalorder %s31, 0
      %p124 = por %p122, %p123
      %p125 = scmp.ne.s32.totalorder %s117, %s119
      %p126 = scmp.eq.s32.totalorder %s36, 1
      %p127 = por %p125, %p126
      %p128 = scmp.ne.s32.totalorder %s119, %s120
      %p129 = scmp.eq.s32.totalorder %s36, 0
      %p130 = por %p128, %p129
      %p131 = scmp.ne.s32.totalorder %s119, %s120
      %p132 = scmp.eq.s32.totalorder %s37, 1
      %p133 = por %p131, %p132
      %p135 = scmp.ne.s32.totalorder %s120, %s134
      %p136 = scmp.eq.s32.totalorder %s37, 0
      %p137 = por %p135, %p136
      %s139 = sadd.s32 %s138, 1
      %p142 = scmp.eq.s32.totalorder %s31, 1
      %p143 = scmp.ne.s32.totalorder %s138, %s140
      %p144 = scmp.eq.s32.totalorder %s31, 0
      %p145 = por %p143, %p144
      %p146 = scmp.ne.s32.totalorder %s138, %s140
      %p147 = scmp.eq.s32.totalorder %s36, 1
      %p148 = por %p146, %p147
      %p149 = scmp.ne.s32.totalorder %s140, %s141
      %p150 = scmp.eq.s32.totalorder %s36, 0
      %p151 = por %p149, %p150
      %p152 = scmp.ne.s32.totalorder %s140, %s141
      %p153 = scmp.eq.s32.totalorder %s37, 1
      %p154 = por %p152, %p153
      %p156 = scmp.ne.s32.totalorder %s141, %s155
      %p157 = scmp.eq.s32.totalorder %s37, 0
      %p158 = por %p156, %p157
      %s160 = sadd.s32 %s159, 1
      %p163 = scmp.eq.s32.totalorder %s31, 1
      %p164 = scmp.ne.s32.totalorder %s159, %s161
      %p165 = scmp.eq.s32.totalorder %s31, 0
      %p166 = por %p164, %p165
      %p167 = scmp.ne.s32.totalorder %s159, %s161
      %p168 = scmp.eq.s32.totalorder %s36, 1
      %p169 = por %p167, %p168
      %p170 = scmp.ne.s32.totalorder %s161, %s162
      %p171 = scmp.eq.s32.totalorder %s36, 0
      %p172 = por %p170, %p171
      %p173 = scmp.ne.s32.totalorder %s161, %s162
      %p174 = scmp.eq.s32.totalorder %s37, 1
      %p175 = por %p173, %p174
      %p177 = scmp.ne.s32.totalorder %s162, %s176
      %p178 = scmp.eq.s32.totalorder %s37, 0
      %p179 = por %p177, %p178
      %s181 = sadd.s32 %s180, 1
      %p184 = scmp.eq.s32.totalorder %s31, 1
      %p185 = scmp.ne.s32.totalorder %s180, %s182
      %p186 = scmp.eq.s32.totalorder %s31, 0
      %p187 = por %p185, %p186
      %p188 = scmp.ne.s32.totalorder %s180, %s182
      %p189 = scmp.eq.s32.totalorder %s36, 1
      %p190 = por %p188, %p189
      %p191 = scmp.ne.s32.totalorder %s182, %s183
      %p192 = scmp.eq.s32.totalorder %s36, 0
      %p193 = por %p191, %p192
      %p194 = scmp.ne.s32.totalorder %s182, %s183
      %p195 = scmp.eq.s32.totalorder %s37, 1
      %p196 = por %p194, %p195
      %p198 = scmp.ne.s32.totalorder %s183, %s197
      %p199 = scmp.eq.s32.totalorder %s37, 0
      %p200 = por %p198, %p199
      %s202 = sadd.s32 %s201, 1
      %p205 = scmp.eq.s32.totalorder %s31, 1
      %p206 = scmp.ne.s32.totalorder %s201, %s203
      %p207 = scmp.eq.s32.totalorder %s31, 0
      %p208 = por %p206, %p207
      %p209 = scmp.ne.s32.totalorder %s201, %s203
      %p210 = scmp.eq.s32.totalorder %s36, 1
      %p211 = por %p209, %p210
      %p212 = scmp.ne.s32.totalorder %s203, %s204
      %p213 = scmp.eq.s32.totalorder %s36, 0
      %p214 = por %p212, %p213
      %p215 = scmp.ne.s32.totalorder %s203, %s204
      %p216 = scmp.eq.s32.totalorder %s37, 1
      %p217 = por %p215, %p216
      %p219 = scmp.ne.s32.totalorder %s204, %s218
      %p220 = scmp.eq.s32.totalorder %s37, 0
      %p221 = por %p219, %p220
      %s222 = ssub.s32 %s31, %s38
      %p223 = scmp.eq.s32.totalorder %s222, 0
      %s225 = sadd.s32 %s224, 1
      %s226 = scalar_select %p223, %s224, %s225
      %p229 = pneg %p223
      %p230 = scmp.eq.s32.totalorder %s31, 1
      %p231 = por %p229, %p230
      %p232 = scmp.ne.s32.totalorder %s224, %s227
      %p233 = scmp.eq.s32.totalorder %s31, 0
      %p234 = por %p232, %p233
      %p235 = scmp.ne.s32.totalorder %s224, %s227
      %p236 = scmp.eq.s32.totalorder %s36, 1
      %p237 = por %p235, %p236
      %p238 = scmp.ne.s32.totalorder %s227, %s228
      %p239 = scmp.eq.s32.totalorder %s36, 0
      %p240 = por %p238, %p239
      %p241 = scmp.ne.s32.totalorder %s227, %s228
      %p242 = scmp.eq.s32.totalorder %s37, 1
      %p243 = por %p241, %p242
      %p245 = scmp.ne.s32.totalorder %s228, %s244
      %p246 = scmp.eq.s32.totalorder %s37, 0
      %p247 = por %p245, %p246
      %s248 = ssub.s32 %s31, %s38
      %p249 = scmp.eq.s32.totalorder %s248, 0
      %s251 = sadd.s32 %s250, 1
      %s252 = scalar_select %p249, %s250, %s251
      %p255 = pneg %p249
      %p256 = scmp.eq.s32.totalorder %s31, 1
      %p257 = por %p255, %p256
      %p258 = scmp.ne.s32.totalorder %s250, %s253
      %p259 = scmp.eq.s32.totalorder %s31, 0
      %p260 = por %p258, %p259
      %p261 = scmp.ne.s32.totalorder %s250, %s253
      %p262 = scmp.eq.s32.totalorder %s36, 1
      %p263 = por %p261, %p262
      %p264 = scmp.ne.s32.totalorder %s253, %s254
      %p265 = scmp.eq.s32.totalorder %s36, 0
      %p266 = por %p264, %p265
      %p267 = scmp.ne.s32.totalorder %s253, %s254
      %p268 = scmp.eq.s32.totalorder %s37, 1
      %p269 = por %p267, %p268
      %p271 = scmp.ne.s32.totalorder %s254, %s270
      %p272 = scmp.eq.s32.totalorder %s37, 0
      %p273 = por %p271, %p272
      %s274 = ssub.s32 %s31, %s38
      %p275 = scmp.eq.s32.totalorder %s274, 0
      %s277 = sadd.s32 %s276, 1
      %s278 = scalar_select %p275, %s276, %s277
      %p281 = pneg %p275
      %p282 = scmp.eq.s32.totalorder %s31, 1
      %p283 = por %p281, %p282
      %p284 = scmp.ne.s32.totalorder %s276, %s279
      %p285 = scmp.eq.s32.totalorder %s31, 0
      %p286 = por %p284, %p285
      %p287 = scmp.ne.s32.totalorder %s276, %s279
      %p288 = scmp.eq.s32.totalorder %s36, 1
      %p289 = por %p287, %p288
      %p290 = scmp.ne.s32.totalorder %s279, %s280
      %p291 = scmp.eq.s32.totalorder %s36, 0
      %p292 = por %p290, %p291
      %p293 = scmp.ne.s32.totalorder %s279, %s280
      %p294 = scmp.eq.s32.totalorder %s37, 1
      %p295 = por %p293, %p294
      %p297 = scmp.ne.s32.totalorder %s280, %s296
      %p298 = scmp.eq.s32.totalorder %s37, 0
      %p299 = por %p297, %p298
      %p300 = scmp.le.s32.totalorder 1, %s31
      %p301 = scmp.lt.s32.totalorder %s31, 3
      %p302 = pnand %p300, %p301
      %p303 = pneg %p302
      // Predicated region
      $region9: #{tpu_custom_call.1} parent=5 // pred_check
        _
      $region10: #{tpu_custom_call.1} parent=5 // pred_check_branch
        %305 = sbr.rel (%p302) target = $region12
      $region11: #{tpu_custom_call.1} parent=5 // pred_region
        %s306 = ssub.s32 %s31, 1
        // Predicated region
        $region13: #{tpu_custom_call.1} parent=11 // pred_check
          %p307 = pneg %p130
        $region14: #{tpu_custom_call.1} parent=11 // pred_check_branch
          %309 = sbr.rel (%p307) target = $region16
        $region15: #{tpu_custom_call.1} parent=11 // pred_region
          %311 = vsyncadd [#allocation11], 0
          %s312 = sshll.u32 %s3, 4
          %s313 = int_to_ptr.hbm [resolvable:$true] %s312
          %s314 = sshll.u32 [#allocation10], 4
          %s315 = int_to_ptr.vmem [resolvable:$true] %s314
          %320 = dma.hbm_to_vmem [thread:$0]  %s313, 256, %s315, [#allocation11], 128, 128, 8
        $region16: #{tpu_custom_call.1} parent=11 // pred_fallthru
          _
        // Predicated region
        $region17: #{tpu_custom_call.1} parent=11 // pred_check
          %p321 = pneg %p151
        $region18: #{tpu_custom_call.1} parent=11 // pred_check_branch
          %323 = sbr.rel (%p321) target = $region20
        $region19: #{tpu_custom_call.1} parent=11 // pred_region
          %325 = vsyncadd [#allocation11], 0
          %s326 = sshll.u32 %s4, 4
          %s327 = int_to_ptr.hbm [resolvable:$true] %s326
          %s328 = sshll.u32 [#allocation12], 4
          %s329 = int_to_ptr.vmem [resolvable:$true] %s328
          %334 = dma.hbm_to_vmem [thread:$0]  %s327, 512, %s329, [#allocation11], 128, 128, 8
        $region20: #{tpu_custom_call.1} parent=11 // pred_fallthru
          _
        // Predicated region
        $region21: #{tpu_custom_call.1} parent=11 // pred_check
          %p335 = pneg %p172
        $region22: #{tpu_custom_call.1} parent=11 // pred_check_branch
          %337 = sbr.rel (%p335) target = $region24
        $region23: #{tpu_custom_call.1} parent=11 // pred_region
          _
        $region24: #{tpu_custom_call.1} parent=11 // pred_fallthru
          _
        // Predicated region
        $region25: #{tpu_custom_call.1} parent=11 // pred_check
          %p338 = pneg %p193
        $region26: #{tpu_custom_call.1} parent=11 // pred_check_branch
          %340 = sbr.rel (%p338) target = $region28
        $region27: #{tpu_custom_call.1} parent=11 // pred_region
          %342 = vsyncadd [#allocation14], 0
          %s343 = sshll.u32 %s6, 4
          %s344 = int_to_ptr.hbm [resolvable:$true] %s343
          %s345 = sshll.u32 [#allocation13], 4
          %s346 = int_to_ptr.vmem [resolvable:$true] %s345
          %351 = dma.hbm_to_vmem [thread:$0]  %s344, 512, %s346, [#allocation14], 128, 128, 8
        $region28: #{tpu_custom_call.1} parent=11 // pred_fallthru
          _
        // Predicated region
        $region29: #{tpu_custom_call.1} parent=11 // pred_check
          %p352 = pneg %p214
        $region30: #{tpu_custom_call.1} parent=11 // pred_check_branch
          %354 = sbr.rel (%p352) target = $region32
        $region31: #{tpu_custom_call.1} parent=11 // pred_region
          _
        $region32: #{tpu_custom_call.1} parent=11 // pred_fallthru
          _
      $region12: #{tpu_custom_call.1} parent=5 // pred_fallthru
        _
      %p355 = scmp.lt.s32.totalorder %s31, 2
      // Predicated region
      $region33: #{tpu_custom_call.1} parent=5 // pred_check
        %p356 = pneg %p355
      $region34: #{tpu_custom_call.1} parent=5 // pred_check_branch
        %358 = sbr.rel (%p356) target = $region36
      $region35: #{tpu_custom_call.1} parent=5 // pred_region
        // Predicated region
        $region37: #{tpu_custom_call.1} parent=35 // pred_check
          %p359 = pneg %p51
        $region38: #{tpu_custom_call.1} parent=35 // pred_check_branch
          %361 = sbr.rel (%p359) target = $region40
        $region39: #{tpu_custom_call.1} parent=35 // pred_region
          %s362 = sand.u32 %s41, 1
          %s363 = scalar_lea.sflag [#allocation5], %s362
          %s364 = sand.u32 %s41, 1
          %s365 = smul.addr %s364, 64
          %s366 = scalar_lea.vmem [#allocation4], %s365
          %368 = vsyncadd %s363, 0
          %s369 = smul.addr %s31, 8
          %s370 = scalar_lea.hbm %s0, %s369
          %s371 = sshll.u32 %s370, 4
          %s372 = int_to_ptr.hbm [resolvable:$true] %s371
          %s373 = sshll.u32 %s366, 4
          %s374 = int_to_ptr.vmem [resolvable:$true] %s373
          %379 = dma.hbm_to_vmem [thread:$0]  %s372, 1024, %s374, %s363, 256, 128, 8
        $region40: #{tpu_custom_call.1} parent=35 // pred_fallthru
          _
        // Predicated region
        $region41: #{tpu_custom_call.1} parent=35 // pred_check
          %p380 = pneg %p77
        $region42: #{tpu_custom_call.1} parent=35 // pred_check_branch
          %382 = sbr.rel (%p380) target = $region44
        $region43: #{tpu_custom_call.1} parent=35 // pred_region
          %s383 = sand.u32 %s31, 1
          %s384 = scalar_lea.sflag [#allocation8], %s383
          %s385 = sand.u32 %s67, 1
          %s386 = smul.addr %s385, 8
          %s387 = scalar_lea.vmem [#allocation7], %s386
          %389 = vsyncadd %s384, 0
          %s390 = smul.addr %s31, 8
          %s391 = scalar_lea.hbm %s1, %s390
          %s393 = sshll.u32 %s391, 4
          %s394 = int_to_ptr.hbm [resolvable:$true] %s393
          %s395 = sshll.u32 %s387, 4
          %s396 = int_to_ptr.vmem [resolvable:$true] %s395
          %398 = dma.hbm_to_vmem [thread:$0]  %s394, 128, %s396, %s384
        $region44: #{tpu_custom_call.1} parent=35 // pred_fallthru
          _
        // Predicated region
        $region45: #{tpu_custom_call.1} parent=35 // pred_check
          %p399 = pneg %p103
        $region46: #{tpu_custom_call.1} parent=35 // pred_check_branch
          %401 = sbr.rel (%p399) target = $region48
        $region47: #{tpu_custom_call.1} parent=35 // pred_region
          %s402 = sand.u32 %s31, 1
          %s403 = scalar_lea.sflag [#allocation8], %s402
          %s404 = sand.u32 %s93, 1
          %s405 = smul.addr %s404, 8
          %s406 = scalar_lea.vmem [#allocation9], %s405
          %408 = vsyncadd %s403, 0
          %s409 = smul.addr %s31, 8
          %s410 = scalar_lea.hbm %s2, %s409
          %s412 = sshll.u32 %s410, 4
          %s413 = int_to_ptr.hbm [resolvable:$true] %s412
          %s414 = sshll.u32 %s406, 4
          %s415 = int_to_ptr.vmem [resolvable:$true] %s414
          %417 = dma.hbm_to_vmem [thread:$0]  %s413, 128, %s415, %s403
        $region48: #{tpu_custom_call.1} parent=35 // pred_fallthru
          _
      $region36: #{tpu_custom_call.1} parent=5 // pred_fallthru
        _
      %p418 = scmp.le.s32.totalorder 1, %s31
      %p419 = scmp.lt.s32.totalorder %s31, 3
      %p420 = pnand %p418, %p419
      %p421 = pneg %p420
      // Predicated region
      $region49: #{tpu_custom_call.1} parent=5 // pred_check
        _
      $region50: #{tpu_custom_call.1} parent=5 // pred_check_branch
        %423 = sbr.rel (%p420) target = $region52
      $region51: #{tpu_custom_call.1} parent=5 // pred_region
        %s424 = ssub.s32 %s31, 1
        %s425 = sand.u32 %s44, 1
        %s426 = scalar_lea.sflag [#allocation5], %s425
        %s427 = sand.u32 %s44, 1
        %s428 = smul.addr %s427, 64
        %s429 = scalar_lea.vmem [#allocation4], %s428
        // Predicated region
        $region53: #{tpu_custom_call.1} parent=51 // pred_check
          %p430 = pneg %p57
        $region54: #{tpu_custom_call.1} parent=51 // pred_check_branch
          %432 = sbr.rel (%p430) target = $region56
        $region55: #{tpu_custom_call.1} parent=51 // pred_region
          %434 = dma.done %s426, 1024
        $region56: #{tpu_custom_call.1} parent=51 // pred_fallthru
          _
        %s435 = sand.u32 %s36, 1
        %s436 = scalar_lea.sflag [#allocation8], %s435
        %s437 = sand.u32 %s70, 1
        %s438 = smul.addr %s437, 8
        %s439 = scalar_lea.vmem [#allocation7], %s438
        // Predicated region
        $region57: #{tpu_custom_call.1} parent=51 // pred_check
          %p440 = pneg %p83
        $region58: #{tpu_custom_call.1} parent=51 // pred_check_branch
          %442 = sbr.rel (%p440) target = $region60
        $region59: #{tpu_custom_call.1} parent=51 // pred_region
          %444 = dma.done %s436, 128
        $region60: #{tpu_custom_call.1} parent=51 // pred_fallthru
          _
        %s445 = sand.u32 %s36, 1
        %s446 = scalar_lea.sflag [#allocation8], %s445
        %s447 = sand.u32 %s96, 1
        %s448 = smul.addr %s447, 8
        %s449 = scalar_lea.vmem [#allocation9], %s448
        // Predicated region
        $region61: #{tpu_custom_call.1} parent=51 // pred_check
          %p450 = pneg %p109
        $region62: #{tpu_custom_call.1} parent=51 // pred_check_branch
          %452 = sbr.rel (%p450) target = $region64
        $region63: #{tpu_custom_call.1} parent=51 // pred_region
          %454 = dma.done %s446, 128
        $region64: #{tpu_custom_call.1} parent=51 // pred_fallthru
          _
        // Predicated region
        $region65: #{tpu_custom_call.1} parent=51 // pred_check
          %p455 = pneg %p130
        $region66: #{tpu_custom_call.1} parent=51 // pred_check_branch
          %457 = sbr.rel (%p455) target = $region68
        $region67: #{tpu_custom_call.1} parent=51 // pred_region
          %459 = dma.done [#allocation11], 256
        $region68: #{tpu_custom_call.1} parent=51 // pred_fallthru
          _
        // Predicated region
        $region69: #{tpu_custom_call.1} parent=51 // pred_check
          %p460 = pneg %p151
        $region70: #{tpu_custom_call.1} parent=51 // pred_check_branch
          %462 = sbr.rel (%p460) target = $region72
        $region71: #{tpu_custom_call.1} parent=51 // pred_region
          %464 = dma.done [#allocation11], 512
        $region72: #{tpu_custom_call.1} parent=51 // pred_fallthru
          _
        // Predicated region
        $region73: #{tpu_custom_call.1} parent=51 // pred_check
          %p465 = pneg %p193
        $region74: #{tpu_custom_call.1} parent=51 // pred_check_branch
          %467 = sbr.rel (%p465) target = $region76
        $region75: #{tpu_custom_call.1} parent=51 // pred_region
          %469 = dma.done [#allocation14], 512
        $region76: #{tpu_custom_call.1} parent=51 // pred_fallthru
          _
        %s470 = sand.u32 %s44, 1
        %s471 = scalar_lea.sflag [#allocation5], %s470
        %s472 = sand.u32 %s44, 1
        %s473 = smul.addr %s472, 64
        %s474 = scalar_lea.vmem [#allocation4], %s473
        %p475 = pneg %p57
        %p476 = pneg %p54
        %s477 = sand.u32 %s36, 1
        %s478 = scalar_lea.sflag [#allocation8], %s477
        %s479 = sand.u32 %s70, 1
        %s480 = smul.addr %s479, 8
        %s481 = scalar_lea.vmem [#allocation7], %s480
        %p482 = pneg %p83
        %p483 = pneg %p80
        %s484 = sand.u32 %s36, 1
        %s485 = scalar_lea.sflag [#allocation8], %s484
        %s486 = sand.u32 %s96, 1
        %s487 = smul.addr %s486, 8
        %s488 = scalar_lea.vmem [#allocation9], %s487
        %p489 = pneg %p109
        %p490 = pneg %p106
        %p491 = pneg %p130
        %p492 = pneg %p127
        %p493 = pneg %p151
        %p494 = pneg %p148
        %p495 = pneg %p172
        %p496 = pneg %p169
        %p497 = pneg %p193
        %p498 = pneg %p190
        %p499 = pneg %p214
        %p500 = pneg %p211
        %p501 = pneg %p240
        %p502 = pneg %p237
        %s503 = sand.u32 %s227, 1
        %s504 = scalar_lea.sflag [#allocation6], %s503
        %s505 = sand.u32 %s227, 1
        %s506 = smul.addr %s505, 64
        %s507 = scalar_lea.vmem [#allocation15], %s506
        %p508 = pneg %p266
        %p509 = pneg %p263
        %s510 = sand.u32 %s36, 1
        %s511 = scalar_lea.sflag [#allocation17], %s510
        %s512 = sand.u32 %s253, 1
        %s513 = smul.addr %s512, 8
        %s514 = scalar_lea.vmem [#allocation16], %s513
        %p515 = pneg %p292
        %p516 = pneg %p289
        %s517 = sand.u32 %s36, 1
        %s518 = scalar_lea.sflag [#allocation17], %s517
        %s519 = sand.u32 %s279, 1
        %s520 = smul.addr %s519, 8
        %s521 = scalar_lea.vmem [#allocation18], %s520
        %v522 = vld [vmem:[%s429] sm:$0xff]
        %v523 = vld [vmem:[%s429 + $0x8] sm:$0xff]
        %v524 = vld [vmem:[%s429 + $0x10] sm:$0xff]
        %v525 = vld [vmem:[%s429 + $0x18] sm:$0xff]
        %v526 = vld [vmem:[%s429 + $0x20] sm:$0xff]
        %v527 = vld [vmem:[%s429 + $0x28] sm:$0xff]
        %v528 = vld [vmem:[%s429 + $0x30] sm:$0xff]
        %v529 = vld [vmem:[%s429 + $0x38] sm:$0xff]
        %v530 = vld [vmem:[#allocation10] sm:$0xff]
        %v531 = vld [vmem:[#allocation10 + $0x8] sm:$0xff]
        %v532 = vld [vmem:[%s5] sm:$0x1]
        %v534 = vperm.slane %v532, 0
        %vm536 = vcmask 130048
        %v538 = vsel %vm536, %v522, 0
        %v541 = vsel %vm536, %v523, 0
        %v544 = vsel %vm536, %v524, 0
        %v547 = vsel %vm536, %v525, 0
        %v550 = vsel %vm536, %v526, 0
        %v553 = vsel %vm536, %v527, 0
        %v556 = vsel %vm536, %v528, 0
        %v559 = vsel %vm536, %v529, 0
        %561 = vmatpush.msra.mxu0 0.0
        %562 = vmatpush.msra.mxu0 0.0
        %563 = vmatpush.msra.mxu0 0.0
        %564 = vmatpush.msra.mxu0 0.0
        %565 = vmatpush.msra.mxu0 0.0
        %566 = vmatpush.msra.mxu0 0.0
        %567 = vmatpush.msra.mxu0 0.0
        %568 = vmatpush.msra.mxu0 0.0
        %569 = vmatpush.msra.mxu0 0.0
        %570 = vmatpush.msra.mxu0 0.0
        %571 = vmatpush.msra.mxu0 0.0
        %572 = vmatpush.msra.mxu0 0.0
        %573 = vmatpush.msra.mxu0 0.0
        %574 = vmatpush.msra.mxu0 0.0
        %575 = vmatpush.msra.mxu0 %v531
        %576 = vmatpush.msra.mxu0 %v530
        %577 = vmatmul.f32.gmra.mxu0 %v538
        %v578 = vpop.f32.mrf.mxu0
        %v579 = vadd.f32 %v534, %v578
        %580 = vmatmul.f32.gmra.mxu0 %v541
        %v581 = vpop.f32.mrf.mxu0
        %v582 = vadd.f32 %v534, %v581
        %583 = vmatmul.f32.gmra.mxu0 %v544
        %v584 = vpop.f32.mrf.mxu0
        %v585 = vadd.f32 %v534, %v584
        %586 = vmatmul.f32.gmra.mxu0 %v547
        %v587 = vpop.f32.mrf.mxu0
        %v588 = vadd.f32 %v534, %v587
        %589 = vmatmul.f32.gmra.mxu0 %v550
        %v590 = vpop.f32.mrf.mxu0
        %v591 = vadd.f32 %v534, %v590
        %592 = vmatmul.f32.gmra.mxu0 %v553
        %v593 = vpop.f32.mrf.mxu0
        %v594 = vadd.f32 %v534, %v593
        %595 = vmatmul.f32.gmra.mxu0 %v556
        %v596 = vpop.f32.mrf.mxu0
        %v597 = vadd.f32 %v534, %v596
        %598 = vmatmul.f32.gmra.mxu0 %v559
        %v599 = vpop.f32.mrf.mxu0
        %v600 = vadd.f32 %v534, %v599
        %601 = vdwg.mxu0
        %602 = vst [vmem:[#allocation2] sm:$0xff] %v579
        %603 = vst [vmem:[#allocation2 + $0x8] sm:$0xff] %v582
        %604 = vst [vmem:[#allocation2 + $0x10] sm:$0xff] %v585
        %605 = vst [vmem:[#allocation2 + $0x18] sm:$0xff] %v588
        %606 = vst [vmem:[#allocation2 + $0x20] sm:$0xff] %v591
        %607 = vst [vmem:[#allocation2 + $0x28] sm:$0xff] %v594
        %608 = vst [vmem:[#allocation2 + $0x30] sm:$0xff] %v597
        %609 = vst [vmem:[#allocation2 + $0x38] sm:$0xff] %v600
        %v610 = vld [vmem:[%s439] sm:$0xff]
        %v611 = vld [vmem:[%s449] sm:$0xff]
        %v612 = vld [vmem:[#allocation2] sm:$0xff]
        %v613 = vld [vmem:[#allocation12] sm:$0xff]
        %v614 = vld [vmem:[#allocation12 + $0x8] sm:$0xff]
        %v615 = vld [vmem:[#allocation12 + $0x10] sm:$0xff]
        %v616 = vld [vmem:[#allocation12 + $0x18] sm:$0xff]
        %vm617 = vcmask 261120
        %v619 = vsel %vm617, %v610, 0
        %621 = vmatpush.msra.mxu0 0.0
        %622 = vmatpush.msra.mxu0 0.0
        %623 = vmatpush.msra.mxu0 0.0
        %624 = vmatpush.msra.mxu0 0.0
        %625 = vmatpush.msra.mxu0 0.0
        %626 = vmatpush.msra.mxu0 0.0
        %627 = vmatpush.msra.mxu0 0.0
        %628 = vmatpush.msra.mxu0 0.0
        %629 = vmatpush.msra.mxu0 0.0
        %630 = vmatpush.msra.mxu0 0.0
        %631 = vmatpush.msra.mxu0 0.0
        %632 = vmatpush.msra.mxu0 0.0
        %633 = vmatpush.msra.mxu0 %v616
        %634 = vmatpush.msra.mxu0 %v615
        %635 = vmatpush.msra.mxu0 %v614
        %636 = vmatpush.msra.mxu0 %v613
        %637 = vmatmul.f32.gmra.mxu0 %v619
        %v638 = vpop.f32.mrf.mxu0
        %v639 = vadd.f32 0.0, %v638
        %640 = vdwg.mxu0
        %v641 = vadd.f32 %v612, %v639
        %v642 = vxor.u32 %v641, 2147483648
        %v643 = vmul.f32 %v642, 1.442695
        %v644 = vpow.pop %v643
        %v645 = vadd.f32 %v644, 1.0
        %v646 = vrcp.pop %v645
        %v647 = vmul.f32 %v645, %v646
        %v648 = vsub.f32 1.0, %v647
        %v649 = vmul.f32 %v646, %v648
        %v650 = vadd.f32 %v646, %v649
        %vm651 = vweird.f32 %v645
        %vm652 = vweird.f32 %v646
        %vm653 = vmor %vm651, %vm652
        %v654 = vsel %vm653, %v646, %v650
        %v655 = vand.u32 2147483647, %v645
        %vm656 = vcmp.eq.f32.partialorder %v655, 8.507059e+37
        %v657 = vand.u32 %v645, 2147483648
        %v658 = vor.u32 1.1754944e-38, %v657
        %v659 = vsel %vm656, %v658, %v654
        %v660 = vmul.f32 1.0, %v659
        %v661 = vtanh.pop %v641
        %663 = vrot.lane.b32.xlu0 %v611, 32
        %v664 = vpop.permute.xlu0 %663
        %v666 = vmul.f32 %v660, %v664
        %668 = vrot.lane.b32.xlu0 %v661, 32
        %v669 = vpop.permute.xlu0 %668
        %v671 = vmul.f32 %v660, %v669
        %673 = vrot.lane.b32.xlu0 %v671, 32
        %v674 = vpop.permute.xlu0 %673
        %v676 = vadd.f32 %v666, %v674
        %v677 = vtanh.pop %v676
        %679 = vrot.lane.b32.xlu0 %v677, 32
        %v680 = vpop.permute.xlu0 %679
        %v682 = vmul.f32 %v660, %v680
        %684 = vrot.lane.b32.xlu0 %v682, 64
        %v685 = vpop.permute.xlu0 %684
        %687 = vst.msk [vmem:[#allocation3] sm:$0xff] %vm617, %v685
        %v688 = vld [vmem:[#allocation2 + $0x8] sm:$0xff]
        %v689 = vld [vmem:[#allocation12] sm:$0xff]
        %v690 = vld [vmem:[#allocation12 + $0x8] sm:$0xff]
        %v691 = vld [vmem:[#allocation12 + $0x10] sm:$0xff]
        %v692 = vld [vmem:[#allocation12 + $0x18] sm:$0xff]
        %v693 = vsel %vm617, %v685, 0
        %695 = vmatpush.msra.mxu0 0.0
        %696 = vmatpush.msra.mxu0 0.0
        %697 = vmatpush.msra.mxu0 0.0
        %698 = vmatpush.msra.mxu0 0.0
        %699 = vmatpush.msra.mxu0 0.0
        %700 = vmatpush.msra.mxu0 0.0
        %701 = vmatpush.msra.mxu0 0.0
        %702 = vmatpush.msra.mxu0 0.0
        %703 = vmatpush.msra.mxu0 0.0
        %704 = vmatpush.msra.mxu0 0.0
        %705 = vmatpush.msra.mxu0 0.0
        %706 = vmatpush.msra.mxu0 0.0
        %707 = vmatpush.msra.mxu0 %v692
        %708 = vmatpush.msra.mxu0 %v691
        %709 = vmatpush.msra.mxu0 %v690
        %710 = vmatpush.msra.mxu0 %v689
        %711 = vmatmul.f32.gmra.mxu0 %v693
        %v712 = vpop.f32.mrf.mxu0
        %v713 = vadd.f32 0.0, %v712
        %714 = vdwg.mxu0
        %v715 = vadd.f32 %v688, %v713
        %v716 = vxor.u32 %v715, 2147483648
        %v717 = vmul.f32 %v716, 1.442695
        %v718 = vpow.pop %v717
        %v719 = vadd.f32 %v718, 1.0
        %v720 = vrcp.pop %v719
        %v721 = vmul.f32 %v719, %v720
        %v722 = vsub.f32 1.0, %v721
        %v723 = vmul.f32 %v720, %v722
        %v724 = vadd.f32 %v720, %v723
        %vm725 = vweird.f32 %v719
        %vm726 = vweird.f32 %v720
        %vm727 = vmor %vm725, %vm726
        %v728 = vsel %vm727, %v720, %v724
        %v729 = vand.u32 2147483647, %v719
        %vm730 = vcmp.eq.f32.partialorder %v729, 8.507059e+37
        %v731 = vand.u32 %v719, 2147483648
        %v732 = vor.u32 1.1754944e-38, %v731
        %v733 = vsel %vm730, %v732, %v728
        %v734 = vmul.f32 1.0, %v733
        %v735 = vtanh.pop %v715
        %v736 = vmul.f32 %v734, %v676
        %738 = vrot.lane.b32.xlu0 %v735, 32
        %v739 = vpop.permute.xlu0 %738
        %v741 = vmul.f32 %v734, %v739
        %743 = vrot.lane.b32.xlu0 %v741, 32
        %v744 = vpop.permute.xlu0 %743
        %v746 = vadd.f32 %v736, %v744
        %v747 = vtanh.pop %v746
        %749 = vrot.lane.b32.xlu0 %v747, 32
        %v750 = vpop.permute.xlu0 %749
        %v752 = vmul.f32 %v734, %v750
        %754 = vrot.lane.b32.xlu0 %v752, 64
        %v755 = vpop.permute.xlu0 %754
        %757 = vst.msk [vmem:[#allocation3 + $0x8] sm:$0xff] %vm617, %v755
        %v758 = vld [vmem:[#allocation2 + $0x10] sm:$0xff]
        %v759 = vld [vmem:[#allocation12] sm:$0xff]
        %v760 = vld [vmem:[#allocation12 + $0x8] sm:$0xff]
        %v761 = vld [vmem:[#allocation12 + $0x10] sm:$0xff]
        %v762 = vld [vmem:[#allocation12 + $0x18] sm:$0xff]
        %v763 = vsel %vm617, %v755, 0
        %765 = vmatpush.msra.mxu0 0.0
        %766 = vmatpush.msra.mxu0 0.0
        %767 = vmatpush.msra.mxu0 0.0
        %768 = vmatpush.msra.mxu0 0.0
        %769 = vmatpush.msra.mxu0 0.0
        %770 = vmatpush.msra.mxu0 0.0
        %771 = vmatpush.msra.mxu0 0.0
        %772 = vmatpush.msra.mxu0 0.0
        %773 = vmatpush.msra.mxu0 0.0
        %774 = vmatpush.msra.mxu0 0.0
        %775 = vmatpush.msra.mxu0 0.0
        %776 = vmatpush.msra.mxu0 0.0
        %777 = vmatpush.msra.mxu0 %v762
        %778 = vmatpush.msra.mxu0 %v761
        %779 = vmatpush.msra.mxu0 %v760
        %780 = vmatpush.msra.mxu0 %v759
        %781 = vmatmul.f32.gmra.mxu0 %v763
        %v782 = vpop.f32.mrf.mxu0
        %v783 = vadd.f32 0.0, %v782
        %784 = vdwg.mxu0
        %v785 = vadd.f32 %v758, %v783
        %v786 = vxor.u32 %v785, 2147483648
        %v787 = vmul.f32 %v786, 1.442695
        %v788 = vpow.pop %v787
        %v789 = vadd.f32 %v788, 1.0
        %v790 = vrcp.pop %v789
        %v791 = vmul.f32 %v789, %v790
        %v792 = vsub.f32 1.0, %v791
        %v793 = vmul.f32 %v790, %v792
        %v794 = vadd.f32 %v790, %v793
        %vm795 = vweird.f32 %v789
        %vm796 = vweird.f32 %v790
        %vm797 = vmor %vm795, %vm796
        %v798 = vsel %vm797, %v790, %v794
        %v799 = vand.u32 2147483647, %v789
        %vm800 = vcmp.eq.f32.partialorder %v799, 8.507059e+37
        %v801 = vand.u32 %v789, 2147483648
        %v802 = vor.u32 1.1754944e-38, %v801
        %v803 = vsel %vm800, %v802, %v798
        %v804 = vmul.f32 1.0, %v803
        %v805 = vtanh.pop %v785
        %v806 = vmul.f32 %v804, %v746
        %808 = vrot.lane.b32.xlu0 %v805, 32
        %v809 = vpop.permute.xlu0 %808
        %v811 = vmul.f32 %v804, %v809
        %813 = vrot.lane.b32.xlu0 %v811, 32
        %v814 = vpop.permute.xlu0 %813
        %v816 = vadd.f32 %v806, %v814
        %v817 = vtanh.pop %v816
        %819 = vrot.lane.b32.xlu0 %v817, 32
        %v820 = vpop.permute.xlu0 %819
        %v822 = vmul.f32 %v804, %v820
        %824 = vrot.lane.b32.xlu0 %v822, 64
        %v825 = vpop.permute.xlu0 %824
        %827 = vst.msk [vmem:[#allocation3 + $0x10] sm:$0xff] %vm617, %v825
        %v828 = vld [vmem:[#allocation2 + $0x18] sm:$0xff]
        %v829 = vld [vmem:[#allocation12] sm:$0xff]
        %v830 = vld [vmem:[#allocation12 + $0x8] sm:$0xff]
        %v831 = vld [vmem:[#allocation12 + $0x10] sm:$0xff]
        %v832 = vld [vmem:[#allocation12 + $0x18] sm:$0xff]
        %v833 = vsel %vm617, %v825, 0
        %835 = vmatpush.msra.mxu0 0.0
        %836 = vmatpush.msra.mxu0 0.0
        %837 = vmatpush.msra.mxu0 0.0
        %838 = vmatpush.msra.mxu0 0.0
        %839 = vmatpush.msra.mxu0 0.0
        %840 = vmatpush.msra.mxu0 0.0
        %841 = vmatpush.msra.mxu0 0.0
        %842 = vmatpush.msra.mxu0 0.0
        %843 = vmatpush.msra.mxu0 0.0
        %844 = vmatpush.msra.mxu0 0.0
        %845 = vmatpush.msra.mxu0 0.0
        %846 = vmatpush.msra.mxu0 0.0
        %847 = vmatpush.msra.mxu0 %v832
        %848 = vmatpush.msra.mxu0 %v831
        %849 = vmatpush.msra.mxu0 %v830
        %850 = vmatpush.msra.mxu0 %v829
        %851 = vmatmul.f32.gmra.mxu0 %v833
        %v852 = vpop.f32.mrf.mxu0
        %v853 = vadd.f32 0.0, %v852
        %854 = vdwg.mxu0
        %v855 = vadd.f32 %v828, %v853
        %v856 = vxor.u32 %v855, 2147483648
        %v857 = vmul.f32 %v856, 1.442695
        %v858 = vpow.pop %v857
        %v859 = vadd.f32 %v858, 1.0
        %v860 = vrcp.pop %v859
        %v861 = vmul.f32 %v859, %v860
        %v862 = vsub.f32 1.0, %v861
        %v863 = vmul.f32 %v860, %v862
        %v864 = vadd.f32 %v860, %v863
        %vm865 = vweird.f32 %v859
        %vm866 = vweird.f32 %v860
        %vm867 = vmor %vm865, %vm866
        %v868 = vsel %vm867, %v860, %v864
        %v869 = vand.u32 2147483647, %v859
        %vm870 = vcmp.eq.f32.partialorder %v869, 8.507059e+37
        %v871 = vand.u32 %v859, 2147483648
        %v872 = vor.u32 1.1754944e-38, %v871
        %v873 = vsel %vm870, %v872, %v868
        %v874 = vmul.f32 1.0, %v873
        %v875 = vtanh.pop %v855
        %v876 = vmul.f32 %v874, %v816
        %878 = vrot.lane.b32.xlu0 %v875, 32
        %v879 = vpop.permute.xlu0 %878
        %v881 = vmul.f32 %v874, %v879
        %883 = vrot.lane.b32.xlu0 %v881, 32
        %v884 = vpop.permute.xlu0 %883
        %v886 = vadd.f32 %v876, %v884
        %v887 = vtanh.pop %v886
        %889 = vrot.lane.b32.xlu0 %v887, 32
        %v890 = vpop.permute.xlu0 %889
        %v892 = vmul.f32 %v874, %v890
        %894 = vrot.lane.b32.xlu0 %v892, 64
        %v895 = vpop.permute.xlu0 %894
        %897 = vst.msk [vmem:[#allocation3 + $0x18] sm:$0xff] %vm617, %v895
        %v898 = vld [vmem:[#allocation2 + $0x20] sm:$0xff]
        %v899 = vld [vmem:[#allocation12] sm:$0xff]
        %v900 = vld [vmem:[#allocation12 + $0x8] sm:$0xff]
        %v901 = vld [vmem:[#allocation12 + $0x10] sm:$0xff]
        %v902 = vld [vmem:[#allocation12 + $0x18] sm:$0xff]
        %v903 = vsel %vm617, %v895, 0
        %905 = vmatpush.msra.mxu0 0.0
        %906 = vmatpush.msra.mxu0 0.0
        %907 = vmatpush.msra.mxu0 0.0
        %908 = vmatpush.msra.mxu0 0.0
        %909 = vmatpush.msra.mxu0 0.0
        %910 = vmatpush.msra.mxu0 0.0
        %911 = vmatpush.msra.mxu0 0.0
        %912 = vmatpush.msra.mxu0 0.0
        %913 = vmatpush.msra.mxu0 0.0
        %914 = vmatpush.msra.mxu0 0.0
        %915 = vmatpush.msra.mxu0 0.0
        %916 = vmatpush.msra.mxu0 0.0
        %917 = vmatpush.msra.mxu0 %v902
        %918 = vmatpush.msra.mxu0 %v901
        %919 = vmatpush.msra.mxu0 %v900
        %920 = vmatpush.msra.mxu0 %v899
        %921 = vmatmul.f32.gmra.mxu0 %v903
        %v922 = vpop.f32.mrf.mxu0
        %v923 = vadd.f32 0.0, %v922
        %924 = vdwg.mxu0
        %v925 = vadd.f32 %v898, %v923
        %v926 = vxor.u32 %v925, 2147483648
        %v927 = vmul.f32 %v926, 1.442695
        %v928 = vpow.pop %v927
        %v929 = vadd.f32 %v928, 1.0
        %v930 = vrcp.pop %v929
        %v931 = vmul.f32 %v929, %v930
        %v932 = vsub.f32 1.0, %v931
        %v933 = vmul.f32 %v930, %v932
        %v934 = vadd.f32 %v930, %v933
        %vm935 = vweird.f32 %v929
        %vm936 = vweird.f32 %v930
        %vm937 = vmor %vm935, %vm936
        %v938 = vsel %vm937, %v930, %v934
        %v939 = vand.u32 2147483647, %v929
        %vm940 = vcmp.eq.f32.partialorder %v939, 8.507059e+37
        %v941 = vand.u32 %v929, 2147483648
        %v942 = vor.u32 1.1754944e-38, %v941
        %v943 = vsel %vm940, %v942, %v938
        %v944 = vmul.f32 1.0, %v943
        %v945 = vtanh.pop %v925
        %v946 = vmul.f32 %v944, %v886
        %948 = vrot.lane.b32.xlu0 %v945, 32
        %v949 = vpop.permute.xlu0 %948
        %v951 = vmul.f32 %v944, %v949
        %953 = vrot.lane.b32.xlu0 %v951, 32
        %v954 = vpop.permute.xlu0 %953
        %v956 = vadd.f32 %v946, %v954
        %v957 = vtanh.pop %v956
        %959 = vrot.lane.b32.xlu0 %v957, 32
        %v960 = vpop.permute.xlu0 %959
        %v962 = vmul.f32 %v944, %v960
        %964 = vrot.lane.b32.xlu0 %v962, 64
        %v965 = vpop.permute.xlu0 %964
        %967 = vst.msk [vmem:[#allocation3 + $0x20] sm:$0xff] %vm617, %v965
        %v968 = vld [vmem:[#allocation2 + $0x28] sm:$0xff]
        %v969 = vld [vmem:[#allocation12] sm:$0xff]
        %v970 = vld [vmem:[#allocation12 + $0x8] sm:$0xff]
        %v971 = vld [vmem:[#allocation12 + $0x10] sm:$0xff]
        %v972 = vld [vmem:[#allocation12 + $0x18] sm:$0xff]
        %v973 = vsel %vm617, %v965, 0
        %975 = vmatpush.msra.mxu0 0.0
        %976 = vmatpush.msra.mxu0 0.0
        %977 = vmatpush.msra.mxu0 0.0
        %978 = vmatpush.msra.mxu0 0.0
        %979 = vmatpush.msra.mxu0 0.0
        %980 = vmatpush.msra.mxu0 0.0
        %981 = vmatpush.msra.mxu0 0.0
        %982 = vmatpush.msra.mxu0 0.0
        %983 = vmatpush.msra.mxu0 0.0
        %984 = vmatpush.msra.mxu0 0.0
        %985 = vmatpush.msra.mxu0 0.0
        %986 = vmatpush.msra.mxu0 0.0
        %987 = vmatpush.msra.mxu0 %v972
        %988 = vmatpush.msra.mxu0 %v971
        %989 = vmatpush.msra.mxu0 %v970
        %990 = vmatpush.msra.mxu0 %v969
        %991 = vmatmul.f32.gmra.mxu0 %v973
        %v992 = vpop.f32.mrf.mxu0
        %v993 = vadd.f32 0.0, %v992
        %994 = vdwg.mxu0
        %v995 = vadd.f32 %v968, %v993
        %v996 = vxor.u32 %v995, 2147483648
        %v997 = vmul.f32 %v996, 1.442695
        %v998 = vpow.pop %v997
        %v999 = vadd.f32 %v998, 1.0
        %v1000 = vrcp.pop %v999
        %v1001 = vmul.f32 %v999, %v1000
        %v1002 = vsub.f32 1.0, %v1001
        %v1003 = vmul.f32 %v1000, %v1002
        %v1004 = vadd.f32 %v1000, %v1003
        %vm1005 = vweird.f32 %v999
        %vm1006 = vweird.f32 %v1000
        %vm1007 = vmor %vm1005, %vm1006
        %v1008 = vsel %vm1007, %v1000, %v1004
        %v1009 = vand.u32 2147483647, %v999
        %vm1010 = vcmp.eq.f32.partialorder %v1009, 8.507059e+37
        %v1011 = vand.u32 %v999, 2147483648
        %v1012 = vor.u32 1.1754944e-38, %v1011
        %v1013 = vsel %vm1010, %v1012, %v1008
        %v1014 = vmul.f32 1.0, %v1013
        %v1015 = vtanh.pop %v995
        %v1016 = vmul.f32 %v1014, %v956
        %1018 = vrot.lane.b32.xlu0 %v1015, 32
        %v1019 = vpop.permute.xlu0 %1018
        %v1021 = vmul.f32 %v1014, %v1019
        %1023 = vrot.lane.b32.xlu0 %v1021, 32
        %v1024 = vpop.permute.xlu0 %1023
        %v1026 = vadd.f32 %v1016, %v1024
        %v1027 = vtanh.pop %v1026
        %1029 = vrot.lane.b32.xlu0 %v1027, 32
        %v1030 = vpop.permute.xlu0 %1029
        %v1032 = vmul.f32 %v1014, %v1030
        %1034 = vrot.lane.b32.xlu0 %v1032, 64
        %v1035 = vpop.permute.xlu0 %1034
        %1037 = vst.msk [vmem:[#allocation3 + $0x28] sm:$0xff] %vm617, %v1035
        %v1038 = vld [vmem:[#allocation2 + $0x30] sm:$0xff]
        %v1039 = vld [vmem:[#allocation12] sm:$0xff]
        %v1040 = vld [vmem:[#allocation12 + $0x8] sm:$0xff]
        %v1041 = vld [vmem:[#allocation12 + $0x10] sm:$0xff]
        %v1042 = vld [vmem:[#allocation12 + $0x18] sm:$0xff]
        %v1043 = vsel %vm617, %v1035, 0
        %1045 = vmatpush.msra.mxu0 0.0
        %1046 = vmatpush.msra.mxu0 0.0
        %1047 = vmatpush.msra.mxu0 0.0
        %1048 = vmatpush.msra.mxu0 0.0
        %1049 = vmatpush.msra.mxu0 0.0
        %1050 = vmatpush.msra.mxu0 0.0
        %1051 = vmatpush.msra.mxu0 0.0
        %1052 = vmatpush.msra.mxu0 0.0
        %1053 = vmatpush.msra.mxu0 0.0
        %1054 = vmatpush.msra.mxu0 0.0
        %1055 = vmatpush.msra.mxu0 0.0
        %1056 = vmatpush.msra.mxu0 0.0
        %1057 = vmatpush.msra.mxu0 %v1042
        %1058 = vmatpush.msra.mxu0 %v1041
        %1059 = vmatpush.msra.mxu0 %v1040
        %1060 = vmatpush.msra.mxu0 %v1039
        %1061 = vmatmul.f32.gmra.mxu0 %v1043
        %v1062 = vpop.f32.mrf.mxu0
        %v1063 = vadd.f32 0.0, %v1062
        %1064 = vdwg.mxu0
        %v1065 = vadd.f32 %v1038, %v1063
        %v1066 = vxor.u32 %v1065, 2147483648
        %v1067 = vmul.f32 %v1066, 1.442695
        %v1068 = vpow.pop %v1067
        %v1069 = vadd.f32 %v1068, 1.0
        %v1070 = vrcp.pop %v1069
        %v1071 = vmul.f32 %v1069, %v1070
        %v1072 = vsub.f32 1.0, %v1071
        %v1073 = vmul.f32 %v1070, %v1072
        %v1074 = vadd.f32 %v1070, %v1073
        %vm1075 = vweird.f32 %v1069
        %vm1076 = vweird.f32 %v1070
        %vm1077 = vmor %vm1075, %vm1076
        %v1078 = vsel %vm1077, %v1070, %v1074
        %v1079 = vand.u32 2147483647, %v1069
        %vm1080 = vcmp.eq.f32.partialorder %v1079, 8.507059e+37
        %v1081 = vand.u32 %v1069, 2147483648
        %v1082 = vor.u32 1.1754944e-38, %v1081
        %v1083 = vsel %vm1080, %v1082, %v1078
        %v1084 = vmul.f32 1.0, %v1083
        %v1085 = vtanh.pop %v1065
        %v1086 = vmul.f32 %v1084, %v1026
        %1088 = vrot.lane.b32.xlu0 %v1085, 32
        %v1089 = vpop.permute.xlu0 %1088
        %v1091 = vmul.f32 %v1084, %v1089
        %1093 = vrot.lane.b32.xlu0 %v1091, 32
        %v1094 = vpop.permute.xlu0 %1093
        %v1096 = vadd.f32 %v1086, %v1094
        %v1097 = vtanh.pop %v1096
        %1099 = vrot.lane.b32.xlu0 %v1097, 32
        %v1100 = vpop.permute.xlu0 %1099
        %v1102 = vmul.f32 %v1084, %v1100
        %1104 = vrot.lane.b32.xlu0 %v1102, 64
        %v1105 = vpop.permute.xlu0 %1104
        %1107 = vst.msk [vmem:[#allocation3 + $0x30] sm:$0xff] %vm617, %v1105
        %v1108 = vld [vmem:[#allocation2 + $0x38] sm:$0xff]
        %v1109 = vld [vmem:[#allocation12] sm:$0xff]
        %v1110 = vld [vmem:[#allocation12 + $0x8] sm:$0xff]
        %v1111 = vld [vmem:[#allocation12 + $0x10] sm:$0xff]
        %v1112 = vld [vmem:[#allocation12 + $0x18] sm:$0xff]
        %v1113 = vsel %vm617, %v1105, 0
        %1115 = vmatpush.msra.mxu0 0.0
        %1116 = vmatpush.msra.mxu0 0.0
        %1117 = vmatpush.msra.mxu0 0.0
        %1118 = vmatpush.msra.mxu0 0.0
        %1119 = vmatpush.msra.mxu0 0.0
        %1120 = vmatpush.msra.mxu0 0.0
        %1121 = vmatpush.msra.mxu0 0.0
        %1122 = vmatpush.msra.mxu0 0.0
        %1123 = vmatpush.msra.mxu0 0.0
        %1124 = vmatpush.msra.mxu0 0.0
        %1125 = vmatpush.msra.mxu0 0.0
        %1126 = vmatpush.msra.mxu0 0.0
        %1127 = vmatpush.msra.mxu0 %v1112
        %1128 = vmatpush.msra.mxu0 %v1111
        %1129 = vmatpush.msra.mxu0 %v1110
        %1130 = vmatpush.msra.mxu0 %v1109
        %1131 = vmatmul.f32.gmra.mxu0 %v1113
        %v1132 = vpop.f32.mrf.mxu0
        %v1133 = vadd.f32 0.0, %v1132
        %1134 = vdwg.mxu0
        %v1135 = vadd.f32 %v1108, %v1133
        %v1136 = vxor.u32 %v1135, 2147483648
        %v1137 = vmul.f32 %v1136, 1.442695
        %v1138 = vpow.pop %v1137
        %v1139 = vadd.f32 %v1138, 1.0
        %v1140 = vrcp.pop %v1139
        %v1141 = vmul.f32 %v1139, %v1140
        %v1142 = vsub.f32 1.0, %v1141
        %v1143 = vmul.f32 %v1140, %v1142
        %v1144 = vadd.f32 %v1140, %v1143
        %vm1145 = vweird.f32 %v1139
        %vm1146 = vweird.f32 %v1140
        %vm1147 = vmor %vm1145, %vm1146
        %v1148 = vsel %vm1147, %v1140, %v1144
        %v1149 = vand.u32 2147483647, %v1139
        %vm1150 = vcmp.eq.f32.partialorder %v1149, 8.507059e+37
        %v1151 = vand.u32 %v1139, 2147483648
        %v1152 = vor.u32 1.1754944e-38, %v1151
        %v1153 = vsel %vm1150, %v1152, %v1148
        %v1154 = vmul.f32 1.0, %v1153
        %v1155 = vtanh.pop %v1135
        %v1156 = vmul.f32 %v1154, %v1096
        %1158 = vrot.lane.b32.xlu0 %v1155, 32
        %v1159 = vpop.permute.xlu0 %1158
        %v1161 = vmul.f32 %v1154, %v1159
        %1163 = vrot.lane.b32.xlu0 %v1161, 32
        %v1164 = vpop.permute.xlu0 %1163
        %v1166 = vadd.f32 %v1156, %v1164
        %v1167 = vtanh.pop %v1166
        %1169 = vrot.lane.b32.xlu0 %v1167, 32
        %v1170 = vpop.permute.xlu0 %1169
        %v1172 = vmul.f32 %v1154, %v1170
        %1174 = vrot.lane.b32.xlu0 %v1172, 64
        %v1175 = vpop.permute.xlu0 %1174
        %1177 = vst.msk [vmem:[#allocation3 + $0x38] sm:$0xff] %vm617, %v1175
        %1178 = vst.msk [vmem:[%s514] sm:$0xff] %vm617, %v1175
        %1180 = vrot.lane.b32.xlu0 %v1166, 96
        %v1181 = vpop.permute.xlu0 %1180
        %1183 = vst.msk [vmem:[%s521] sm:$0xff] %vm617, %v1181
        %v1184 = vld [vmem:[#allocation3] sm:$0xff]
        %v1185 = vld [vmem:[#allocation3 + $0x8] sm:$0xff]
        %v1186 = vld [vmem:[#allocation3 + $0x10] sm:$0xff]
        %v1187 = vld [vmem:[#allocation3 + $0x18] sm:$0xff]
        %v1188 = vld [vmem:[#allocation3 + $0x20] sm:$0xff]
        %v1189 = vld [vmem:[#allocation3 + $0x28] sm:$0xff]
        %v1190 = vld [vmem:[#allocation3 + $0x30] sm:$0xff]
        %v1191 = vld [vmem:[#allocation3 + $0x38] sm:$0xff]
        %v1192 = vld [vmem:[#allocation13] sm:$0xff]
        %v1193 = vld [vmem:[#allocation13 + $0x8] sm:$0xff]
        %v1194 = vld [vmem:[#allocation13 + $0x10] sm:$0xff]
        %v1195 = vld [vmem:[#allocation13 + $0x18] sm:$0xff]
        %v1196 = vld [vmem:[%s7] sm:$0x1]
        %v1198 = vperm.slane %v1196, 0
        %v1201 = vsel %vm617, %v1184, 0
        %v1204 = vsel %vm617, %v1185, 0
        %v1207 = vsel %vm617, %v1186, 0
        %v1210 = vsel %vm617, %v1187, 0
        %v1213 = vsel %vm617, %v1188, 0
        %v1216 = vsel %vm617, %v1189, 0
        %v1219 = vsel %vm617, %v1190, 0
        %v1222 = vsel %vm617, %v1191, 0
        %1224 = vmatpush.msra.mxu0 0.0
        %1225 = vmatpush.msra.mxu0 0.0
        %1226 = vmatpush.msra.mxu0 0.0
        %1227 = vmatpush.msra.mxu0 0.0
        %1228 = vmatpush.msra.mxu0 0.0
        %1229 = vmatpush.msra.mxu0 0.0
        %1230 = vmatpush.msra.mxu0 0.0
        %1231 = vmatpush.msra.mxu0 0.0
        %1232 = vmatpush.msra.mxu0 0.0
        %1233 = vmatpush.msra.mxu0 0.0
        %1234 = vmatpush.msra.mxu0 0.0
        %1235 = vmatpush.msra.mxu0 0.0
        %1236 = vmatpush.msra.mxu0 %v1195
        %1237 = vmatpush.msra.mxu0 %v1194
        %1238 = vmatpush.msra.mxu0 %v1193
        %1239 = vmatpush.msra.mxu0 %v1192
        %1240 = vmatmul.f32.gmra.mxu0 %v1201
        %v1241 = vpop.f32.mrf.mxu0
        %v1242 = vadd.f32 %v1198, %v1241
        %1243 = vmatmul.f32.gmra.mxu0 %v1204
        %v1244 = vpop.f32.mrf.mxu0
        %v1245 = vadd.f32 %v1198, %v1244
        %1246 = vmatmul.f32.gmra.mxu0 %v1207
        %v1247 = vpop.f32.mrf.mxu0
        %v1248 = vadd.f32 %v1198, %v1247
        %1249 = vmatmul.f32.gmra.mxu0 %v1210
        %v1250 = vpop.f32.mrf.mxu0
        %v1251 = vadd.f32 %v1198, %v1250
        %1252 = vmatmul.f32.gmra.mxu0 %v1213
        %v1253 = vpop.f32.mrf.mxu0
        %v1254 = vadd.f32 %v1198, %v1253
        %1255 = vmatmul.f32.gmra.mxu0 %v1216
        %v1256 = vpop.f32.mrf.mxu0
        %v1257 = vadd.f32 %v1198, %v1256
        %1258 = vmatmul.f32.gmra.mxu0 %v1219
        %v1259 = vpop.f32.mrf.mxu0
        %v1260 = vadd.f32 %v1198, %v1259
        %1261 = vmatmul.f32.gmra.mxu0 %v1222
        %v1262 = vpop.f32.mrf.mxu0
        %v1263 = vadd.f32 %v1198, %v1262
        %1264 = vdwg.mxu0
        %1265 = vst [vmem:[%s507] sm:$0xff] %v1242
        %1266 = vst [vmem:[%s507 + $0x8] sm:$0xff] %v1245
        %1267 = vst [vmem:[%s507 + $0x10] sm:$0xff] %v1248
        %1268 = vst [vmem:[%s507 + $0x18] sm:$0xff] %v1251
        %1269 = vst [vmem:[%s507 + $0x20] sm:$0xff] %v1254
        %1270 = vst [vmem:[%s507 + $0x28] sm:$0xff] %v1257
        %1271 = vst [vmem:[%s507 + $0x30] sm:$0xff] %v1260
        %1272 = vst [vmem:[%s507 + $0x38] sm:$0xff] %v1263
        %s1273 = sand.u32 %s227, 1
        %s1274 = scalar_lea.sflag [#allocation6], %s1273
        %s1275 = sand.u32 %s227, 1
        %s1276 = smul.addr %s1275, 64
        %s1277 = scalar_lea.vmem [#allocation15], %s1276
        %s1278 = sand.u32 %s36, 1
        %s1279 = scalar_lea.sflag [#allocation17], %s1278
        %s1280 = sand.u32 %s253, 1
        %s1281 = smul.addr %s1280, 8
        %s1282 = scalar_lea.vmem [#allocation16], %s1281
        %s1283 = sand.u32 %s36, 1
        %s1284 = scalar_lea.sflag [#allocation17], %s1283
        %s1285 = sand.u32 %s279, 1
        %s1286 = smul.addr %s1285, 8
        %s1287 = scalar_lea.vmem [#allocation18], %s1286
        // Predicated region
        $region77: #{tpu_custom_call.1} parent=51 // pred_check
          %p1288 = pneg %p237
        $region78: #{tpu_custom_call.1} parent=51 // pred_check_branch
          %1290 = sbr.rel (%p1288) target = $region80
        $region79: #{tpu_custom_call.1} parent=51 // pred_region
          %1292 = vsyncadd %s1274, 0
          %s1293 = smul.addr %s36, 8
          %s1294 = scalar_lea.hbm %s8, %s1293
          %s1295 = sshll.u32 %s1277, 4
          %s1296 = int_to_ptr.vmem [resolvable:$true] %s1295
          %s1297 = sshll.u32 %s1294, 4
          %s1298 = int_to_ptr.hbm [resolvable:$true] %s1297
          %1303 = dma.vmem_to_hbm [thread:$0]  %s1296, 1024, %s1298, %s1274, 128, 256, 8
        $region80: #{tpu_custom_call.1} parent=51 // pred_fallthru
          _
        // Predicated region
        $region81: #{tpu_custom_call.1} parent=51 // pred_check
          %p1304 = pneg %p263
        $region82: #{tpu_custom_call.1} parent=51 // pred_check_branch
          %1306 = sbr.rel (%p1304) target = $region84
        $region83: #{tpu_custom_call.1} parent=51 // pred_region
          %1308 = vsyncadd %s1279, 0
          %s1309 = smul.addr %s36, 8
          %s1310 = scalar_lea.hbm %s9, %s1309
          %s1312 = sshll.u32 %s1282, 4
          %s1313 = int_to_ptr.vmem [resolvable:$true] %s1312
          %s1314 = sshll.u32 %s1310, 4
          %s1315 = int_to_ptr.hbm [resolvable:$true] %s1314
          %1317 = dma.vmem_to_hbm [thread:$0]  %s1313, 128, %s1315, %s1279
        $region84: #{tpu_custom_call.1} parent=51 // pred_fallthru
          _
        // Predicated region
        $region85: #{tpu_custom_call.1} parent=51 // pred_check
          %p1318 = pneg %p289
        $region86: #{tpu_custom_call.1} parent=51 // pred_check_branch
          %1320 = sbr.rel (%p1318) target = $region88
        $region87: #{tpu_custom_call.1} parent=51 // pred_region
          %1322 = vsyncadd %s1284, 0
          %s1323 = smul.addr %s36, 8
          %s1324 = scalar_lea.hbm %s10, %s1323
          %s1326 = sshll.u32 %s1287, 4
          %s1327 = int_to_ptr.vmem [resolvable:$true] %s1326
          %s1328 = sshll.u32 %s1324, 4
          %s1329 = int_to_ptr.hbm [resolvable:$true] %s1328
          %1331 = dma.vmem_to_hbm [thread:$0]  %s1327, 128, %s1329, %s1284
        $region88: #{tpu_custom_call.1} parent=51 // pred_fallthru
          _
      $region52: #{tpu_custom_call.1} parent=5 // pred_fallthru
        _
      %p1332 = scmp.le.s32.totalorder 2, %s31
      // Predicated region
      $region89: #{tpu_custom_call.1} parent=5 // pred_check
        %p1333 = pneg %p1332
      $region90: #{tpu_custom_call.1} parent=5 // pred_check_branch
        %1335 = sbr.rel (%p1333) target = $region92
      $region91: #{tpu_custom_call.1} parent=5 // pred_region
        %s1336 = ssub.s32 %s31, 2
        // Predicated region
        $region93: #{tpu_custom_call.1} parent=91 // pred_check
          %p1337 = pneg %p243
        $region94: #{tpu_custom_call.1} parent=91 // pred_check_branch
          %1339 = sbr.rel (%p1337) target = $region96
        $region95: #{tpu_custom_call.1} parent=91 // pred_region
          %s1340 = sand.u32 %s228, 1
          %s1341 = scalar_lea.sflag [#allocation6], %s1340
          %s1342 = sand.u32 %s228, 1
          %s1343 = smul.addr %s1342, 64
          %s1344 = scalar_lea.vmem [#allocation15], %s1343
          %1346 = dma.done %s1341, 1024
        $region96: #{tpu_custom_call.1} parent=91 // pred_fallthru
          _
        // Predicated region
        $region97: #{tpu_custom_call.1} parent=91 // pred_check
          %p1347 = pneg %p269
        $region98: #{tpu_custom_call.1} parent=91 // pred_check_branch
          %1349 = sbr.rel (%p1347) target = $region100
        $region99: #{tpu_custom_call.1} parent=91 // pred_region
          %s1350 = sand.u32 %s37, 1
          %s1351 = scalar_lea.sflag [#allocation17], %s1350
          %s1352 = sand.u32 %s254, 1
          %s1353 = smul.addr %s1352, 8
          %s1354 = scalar_lea.vmem [#allocation16], %s1353
          %1356 = dma.done %s1351, 128
        $region100: #{tpu_custom_call.1} parent=91 // pred_fallthru
          _
        // Predicated region
        $region101: #{tpu_custom_call.1} parent=91 // pred_check
          %p1357 = pneg %p295
        $region102: #{tpu_custom_call.1} parent=91 // pred_check_branch
          %1359 = sbr.rel (%p1357) target = $region104
        $region103: #{tpu_custom_call.1} parent=91 // pred_region
          %s1360 = sand.u32 %s37, 1
          %s1361 = scalar_lea.sflag [#allocation17], %s1360
          %s1362 = sand.u32 %s280, 1
          %s1363 = smul.addr %s1362, 8
          %s1364 = scalar_lea.vmem [#allocation18], %s1363
          %1366 = dma.done %s1361, 128
        $region104: #{tpu_custom_call.1} parent=91 // pred_fallthru
          _
      $region92: #{tpu_custom_call.1} parent=5 // pred_fallthru
        _
    $region6: #{tpu_custom_call.1} parent=1 // loop_footer
      %s35 = sadd.s32 1, %s31
    $region7: #{tpu_custom_call.1} parent=1 // loop_footer_branch
      %30 = sbr.rel target = $region3
    $region8: #{tpu_custom_call.1} parent=1 // loop_exit
      _
    %1367 = vsyncpa [#allocation5], 1
    %s1368 = scalar_lea.sflag [#allocation5], 1
    %1369 = vsyncpa %s1368, 1
    %1370 = vsyncpa [#allocation8], 1
    %s1371 = scalar_lea.sflag [#allocation8], 1
    %1372 = vsyncpa %s1371, 1
    %1373 = vsyncpa [#allocation11], 1
    %1374 = vsyncpa [#allocation14], 1
    %1375 = vsyncpa [#allocation6], 1
    %s1376 = scalar_lea.sflag [#allocation6], 1
    %1377 = vsyncpa %s1376, 1
    %1378 = vsyncpa [#allocation17], 1
    %s1379 = scalar_lea.sflag [#allocation17], 1
    %1380 = vsyncpa %s1379, 1

</llo_original>
